<compile_context>
chip_gen: v7x
topology: tpu7x:2x2x1
jax: 0.10.0
libtpu: 0.0.40
codegen_flags: <defaults>
</compile_context>

<pallas_src>
import functools

import jax
import jax.numpy as jnp
from jax import lax
from jax.experimental import pallas as pl
from jax.experimental.pallas import tpu as pltpu

EPS = 1e-5
LANE = 128


def _rup(x, m):
    return ((x + m - 1) // m) * m


# ----------------------- GEMM + fused BN statistics -------------------------

def _gemm_stats_kernel(a_ref, b_ref, o_ref, stats_ref, acc_ref):
    k = pl.program_id(2)

    @pl.when(k == 0)
    def _():
        acc_ref[...] = jnp.zeros_like(acc_ref)

    acc_ref[...] += jnp.dot(a_ref[...], b_ref[...],
                            preferred_element_type=jnp.float32)

    @pl.when(k == pl.num_programs(2) - 1)
    def _():
        acc = acc_ref[...]
        o_ref[...] = acc
        tn = acc.shape[1]
        colsum = jnp.sum(acc, axis=0, keepdims=True)        # (1, tn)
        colsq = jnp.sum(acc * acc, axis=0, keepdims=True)   # (1, tn)
        stats_ref[...] = jnp.concatenate(
            [colsum, colsq, jnp.zeros((6, tn), jnp.float32)], axis=0)[None]


def gemm_with_stats(a, b):
    """(M,K) bf16 @ (K,N) bf16 -> ((M,N) f32, per-col sum, per-col sum-sq)."""
    M, K = a.shape
    K2, N = b.shape
    assert K == K2

    tm = min(256, _rup(M, 8))
    np128 = _rup(N, LANE)
    tn = next((t for t in (256, 128) if np128 % t == 0), 128)
    kp128 = _rup(K, LANE)
    tk = next((t for t in (512, 384, 256, 128) if kp128 % t == 0), 512)

    Mp, Kp, Np = _rup(M, tm), _rup(K, tk), _rup(N, tn)
    a = jnp.pad(a, ((0, Mp - M), (0, Kp - K)))
    b = jnp.pad(b, ((0, Kp - K), (0, Np - N)))
    gi, gj, gk = Mp // tm, Np // tn, Kp // tk

    out, stats = pl.pallas_call(
        _gemm_stats_kernel,
        out_shape=(jax.ShapeDtypeStruct((Mp, Np), jnp.float32),
                   jax.ShapeDtypeStruct((gi, 8, Np), jnp.float32)),
        grid=(gi, gj, gk),
        in_specs=[pl.BlockSpec((tm, tk), lambda i, j, k: (i, k)),
                  pl.BlockSpec((tk, tn), lambda i, j, k: (k, j))],
        out_specs=(pl.BlockSpec((tm, tn), lambda i, j, k: (i, j)),
                   pl.BlockSpec((1, 8, tn), lambda i, j, k: (i, 0, j))),
        scratch_shapes=[pltpu.VMEM((tm, tn), jnp.float32)],
        compiler_params=pltpu.CompilerParams(
            dimension_semantics=("parallel", "parallel", "arbitrary"),
            vmem_limit_bytes=32 * 1024 * 1024),
    )(a, b)

    out = out[:M, :N]
    colsum = jnp.sum(stats[:, 0, :N], axis=0)      # padded A rows are zero
    colsumsq = jnp.sum(stats[:, 1, :N], axis=0)
    return out, colsum, colsumsq


# --------------------- BN folded to per-channel affine ----------------------

def _bn_scale_shift(colsum, colsumsq, count, gamma, beta):
    mean = colsum / count
    var = jnp.maximum(colsumsq / count - mean * mean, 0.0)  # biased (PyTorch fwd)
    scale = gamma * lax.rsqrt(var + EPS)
    shift = beta - mean * scale
    return scale, shift


def _affine_kernel(x_ref, s_ref, t_ref, o_ref, *, relu):
    y = x_ref[...] * s_ref[...] + t_ref[...]
    if relu:
        y = jnp.maximum(y, 0.0)
    o_ref[...] = y.astype(o_ref.dtype)


def bn_apply(x, scale, shift, *, relu, out_dtype):
    """y = x * scale + shift (+ ReLU), tiled over rows, per-channel params."""
    M, C = x.shape
    tm = min(256, _rup(M, 8))
    Mp = _rup(M, tm)
    xp = jnp.pad(x, ((0, Mp - M), (0, 0)))
    out = pl.pallas_call(
        functools.partial(_affine_kernel, relu=relu),
        out_shape=jax.ShapeDtypeStruct((Mp, C), out_dtype),
        grid=(Mp // tm,),
        in_specs=[pl.BlockSpec((tm, C), lambda i: (i, 0)),
                  pl.BlockSpec((1, C), lambda i: (0, 0)),
                  pl.BlockSpec((1, C), lambda i: (0, 0))],
        out_specs=pl.BlockSpec((tm, C), lambda i: (i, 0)),
        compiler_params=pltpu.CompilerParams(
            dimension_semantics=("parallel",)),
    )(xp, scale.reshape(1, C), shift.reshape(1, C))
    return out[:M]


def _bn2_add_relu_kernel(x_ref, r_ref, sx_ref, tx_ref, sr_ref, tr_ref, o_ref):
    y = x_ref[...] * sx_ref[...] + tx_ref[...]
    z = r_ref[...] * sr_ref[...] + tr_ref[...]
    o_ref[...] = jnp.maximum(y + z, 0.0)


def bn_add_relu(x, r, sx, tx, sr, tr):
    """relu(BN2(x) + BN_sc(r)) with both BNs folded to per-channel affines."""
    M, C = x.shape
    tm = min(256, _rup(M, 8))
    Mp = _rup(M, tm)
    xp = jnp.pad(x, ((0, Mp - M), (0, 0)))
    rp = jnp.pad(r, ((0, Mp - M), (0, 0)))
    out = pl.pallas_call(
        _bn2_add_relu_kernel,
        out_shape=jax.ShapeDtypeStruct((Mp, C), jnp.float32),
        grid=(Mp // tm,),
        in_specs=[pl.BlockSpec((tm, C), lambda i: (i, 0)),
                  pl.BlockSpec((tm, C), lambda i: (i, 0)),
                  pl.BlockSpec((1, C), lambda i: (0, 0)),
                  pl.BlockSpec((1, C), lambda i: (0, 0)),
                  pl.BlockSpec((1, C), lambda i: (0, 0)),
                  pl.BlockSpec((1, C), lambda i: (0, 0))],
        out_specs=pl.BlockSpec((tm, C), lambda i: (i, 0)),
        compiler_params=pltpu.CompilerParams(
            dimension_semantics=("parallel",)),
    )(xp, rp, sx.reshape(1, C), tx.reshape(1, C),
      sr.reshape(1, C), tr.reshape(1, C))
    return out[:M]


# ------------------------------ conv via im2col -----------------------------

def _im2col(x, kh_size, kw_size, stride, padding):
    """x: (N, H, W, C) -> (N*Ho*Wo, KH*KW*C); column order (kh, kw, c)."""
    N, H, W, C = x.shape
    xp = jnp.pad(x, ((0, 0), (padding, padding), (padding, padding), (0, 0)))
    Ho = (H + 2 * padding - kh_size) // stride + 1
    Wo = (W + 2 * padding - kw_size) // stride + 1
    cols = [xp[:, kh:kh + stride * Ho:stride, kw:kw + stride * Wo:stride, :]
            for kh in range(kh_size) for kw in range(kw_size)]
    a = jnp.concatenate(cols, axis=-1).reshape(N * Ho * Wo,
                                               kh_size * kw_size * C)
    return a, Ho, Wo


# --------------------------- parameter preparation --------------------------

def prepare_params(params, in_planes, planes):
    """Hoisted out of the forward path: pad channels to 128, reshape conv
    weights to GEMM layout, cast MXU operands to bf16."""
    cpi = _rup(in_planes, LANE)
    cp = _rup(planes, LANE)

    def conv_w(w, ci_pad, co_pad):
        co, ci, kh, kw = w.shape
        w = jnp.pad(w, ((0, co_pad - co), (0, ci_pad - ci), (0, 0), (0, 0)))
        w = jnp.transpose(w, (2, 3, 1, 0)).reshape(kh * kw * ci_pad, co_pad)
        return w.astype(jnp.bfloat16)

    def vec(v):
        return jnp.pad(v, (0, cp - v.shape[0])).astype(jnp.float32)

    prepared = {
        "w1": conv_w(params["w1"], cpi, cp),
        "w2": conv_w(params["w2"], cp, cp),
        "g1": vec(params["g1"]), "b1": vec(params["b1"]),
        "g2": vec(params["g2"]), "b2": vec(params["b2"]),
    }
    if "wsc" in params:
        prepared["wsc"] = conv_w(params["wsc"], cpi, cp)
        prepared["gsc"] = vec(params["gsc"])
        prepared["bsc"] = vec(params["bsc"])
    return prepared


# --------------------------------- forward ----------------------------------

def basic_block_forward(x_nchw, p, *, stride, in_planes, planes):
    N, Cin, H, W = x_nchw.shape
    cpi = _rup(in_planes, LANE)
    cp = _rup(planes, LANE)

    x_nhwc = jnp.transpose(x_nchw, (0, 2, 3, 1)).astype(jnp.float32)
    x_pad = jnp.pad(x_nhwc, ((0, 0), (0, 0), (0, 0), (0, cpi - Cin)))
    x_bf16 = x_pad.astype(jnp.bfloat16)

    # conv1 (3x3, stride) with fused BN1 statistics
    a1, Ho, Wo = _im2col(x_bf16, 3, 3, stride, 1)           # (M, 9*cpi) bf16
    M = N * Ho * Wo
    o1, s1, q1 = gemm_with_stats(a1, p["w1"])               # (M, cp) f32
    scale1, shift1 = _bn_scale_shift(s1, q1, M, p["g1"], p["b1"])

    # BN1 + ReLU fused; emit bf16 directly for the conv2 MXU path
    o1_act = bn_apply(o1, scale1, shift1, relu=True, out_dtype=jnp.bfloat16)

    # conv2 (3x3, stride 1) with fused BN2 statistics
    a2, _, _ = _im2col(o1_act.reshape(N, Ho, Wo, cp), 3, 3, 1, 1)
    o2, s2, q2 = gemm_with_stats(a2, p["w2"])               # (M, cp) f32
    scale2, shift2 = _bn_scale_shift(s2, q2, M, p["g2"], p["b2"])

    # shortcut
    if stride != 1 or in_planes != planes:
        # TODO(synk): stride-subsample is an XLA slice; a strided in-kernel
        #             load (pl.ds with stride) would avoid this extra copy.
        xs = x_bf16[:, ::stride, ::stride, :].reshape(M, cpi)
        sc, ss, qs = gemm_with_stats(xs, p["wsc"])          # (M, cp) f32
        scale_sc, shift_sc = _bn_scale_shift(ss, qs, M, p["gsc"], p["bsc"])
    else:
        sc = x_pad.reshape(M, cp)
        scale_sc = jnp.ones((cp,), jnp.float32)
        shift_sc = jnp.zeros((cp,), jnp.float32)

    # BN2 + shortcut-BN + residual add + ReLU, fused in one kernel
    out = bn_add_relu(o2, sc, scale2, shift2, scale_sc, shift_sc)
    out = out.reshape(N, Ho, Wo, cp)[:, :, :, :planes]
    return jnp.transpose(out, (0, 3, 1, 2))                 # -> NCHW f32


# ---------------------- precision-matched JAX reference ----------------------

def reference_forward(x, params, stride):
    """Pure-JAX reference.  Conv inputs are rounded to bf16 (f32 accumulate),
    matching the bf16 MXU path of the Pallas kernels; BN in f32."""
    def conv(a, w, s, p):
        a = a.astype(jnp.bfloat16).astype(jnp.float32)
        w = w.astype(jnp.bfloat16).astype(jnp.float32)
        return lax.conv_general_dilated(
            a, w, (s, s), [(p, p), (p, p)],
            dimension_numbers=("NCHW", "OIHW", "NCHW"))

    def bn(a, g, b):
        mean = jnp.mean(a, axis=(0, 2, 3), keepdims=True)
        var = jnp.mean((a - mean) ** 2, axis=(0, 2, 3), keepdims=True)
        return (a - mean) * lax.rsqrt(var + EPS) * g.reshape(1, -1, 1, 1) \
               + b.reshape(1, -1, 1, 1)

    out = jax.nn.relu(bn(conv(x, params["w1"], stride, 1),
                         params["g1"], params["b1"]))
    out = bn(conv(out, params["w2"], 1, 1), params["g2"], params["b2"])
    if stride != 1 or x.shape[1] != params["w1"].shape[0]:
        sc = bn(conv(x, params["wsc"], stride, 0), params["gsc"], params["bsc"])
    else:
        sc = x
    return jax.nn.relu(out + sc)


# ------------------------------------ main -----------------------------------

if __name__ == "__main__":
    key = jax.random.PRNGKey(0)

    def make_params(k, in_planes, planes, with_sc):
        ks = jax.random.split(k, 10)
        params = dict(
            w1=0.1 * jax.random.normal(ks[1], (planes, in_planes, 3, 3), jnp.float32),
            g1=1.0 + 0.1 * jax.random.normal(ks[2], (planes,), jnp.float32),
            b1=0.1 * jax.random.normal(ks[3], (planes,), jnp.float32),
            w2=0.1 * jax.random.normal(ks[4], (planes, planes, 3, 3), jnp.float32),
            g2=1.0 + 0.1 * jax.random.normal(ks[5], (planes,), jnp.float32),
            b2=0.1 * jax.random.normal(ks[6], (planes,), jnp.float32),
        )
        if with_sc:
            params.update(
                wsc=0.1 * jax.random.normal(ks[7], (planes, in_planes, 1, 1), jnp.float32),
                gsc=1.0 + 0.1 * jax.random.normal(ks[8], (planes,), jnp.float32),
                bsc=0.1 * jax.random.normal(ks[9], (planes,), jnp.float32),
            )
        return params

    N, H, W = 2, 16, 16
    # (in_planes, planes, stride): projection-shortcut and identity-shortcut
    for in_planes, planes, stride in [(4, 8, 2), (8, 8, 1)]:
        kx, kp, key = jax.random.split(key, 3)
        x = jax.random.normal(kx, (N, in_planes, H, W), jnp.float32)
        with_sc = (stride != 1) or (in_planes != planes)
        params = make_params(kp, in_planes, planes, with_sc)
        prepared = prepare_params(params, in_planes, planes)

        fwd = jax.jit(functools.partial(
            basic_block_forward, stride=stride,
            in_planes=in_planes, planes=planes))
        out = jax.block_until_ready(fwd(x, prepared))
        ref = reference_forward(x, params, stride)

        Ho = (H + 2 - 3) // stride + 1
        Wo = (W + 2 - 3) // stride + 1
        assert out.shape == (N, planes, Ho, Wo), out.shape
        err = float(jnp.max(jnp.abs(out - ref)))
        assert jnp.allclose(out, ref, atol=1e-2, rtol=1e-2), err

    print("KERNEL_OK")
</pallas_src>

<mosaic_0001>
module attributes {stable_mosaic.version = 11 : i64} {
  func.func @_gemm_stats_kernel(%arg0: i32, %arg1: i32, %arg2: i32, %arg3: memref<128x128xbf16, #tpu.memory_space<vmem>>, %arg4: memref<128x128xbf16, #tpu.memory_space<vmem>>, %arg5: memref<128x128xf32, #tpu.memory_space<vmem>>, %arg6: memref<1x8x128xf32, #tpu.memory_space<vmem>>, %arg7: memref<128x128xf32, #tpu.memory_space<vmem>>) attributes {dimension_semantics = [#tpu.dimension_semantics<parallel>, #tpu.dimension_semantics<parallel>, #tpu.dimension_semantics<arbitrary>], iteration_bounds = array<i64: 1, 1, 1>, scalar_prefetch = 0 : i64, scratch_operands = 1 : i64, tpu.core_type = #tpu.core_type<tc>, window_params = [{transform_indices = @transform_0, window_bounds = array<i64: 128, 128>}, {transform_indices = @transform_1, window_bounds = array<i64: 128, 128>}, {transform_indices = @transform_2, window_bounds = array<i64: 128, 128>}, {transform_indices = @transform_3, window_bounds = array<i64: 1, 8, 128>}]} {
    %c0_i32 = arith.constant 0 : i32
    %0 = arith.cmpi eq, %arg2, %c0_i32 : i32
    %1 = arith.extui %0 : i1 to i32
    %c0_i32_0 = arith.constant 0 : i32
    %2 = arith.cmpi ne, %1, %c0_i32_0 : i32
    scf.if %2 {
      %cst_10 = arith.constant 0.000000e+00 : f32
      %12 = vector.broadcast %cst_10 : f32 to vector<128x128xf32>
      %c0_11 = arith.constant 0 : index
      %c0_12 = arith.constant 0 : index
      %13 = vector.load %arg7[%c0_11, %c0_12] : memref<128x128xf32, #tpu.memory_space<vmem>>, vector<128x128xf32>
      tpu.vector_store %arg7[%c0_11, %c0_12], %12 {strides = array<i32>} : memref<128x128xf32, #tpu.memory_space<vmem>>, vector<128x128xf32>,
    } else {
    }
    %c0 = arith.constant 0 : index
    %c0_1 = arith.constant 0 : index
    %3 = vector.load %arg7[%c0, %c0_1] : memref<128x128xf32, #tpu.memory_space<vmem>>, vector<128x128xf32>
    %c0_2 = arith.constant 0 : index
    %c0_3 = arith.constant 0 : index
    %4 = vector.load %arg3[%c0_2, %c0_3] : memref<128x128xbf16, #tpu.memory_space<vmem>>, vector<128x128xbf16>
    %c0_4 = arith.constant 0 : index
    %c0_5 = arith.constant 0 : index
    %5 = vector.load %arg4[%c0_4, %c0_5] : memref<128x128xbf16, #tpu.memory_space<vmem>>, vector<128x128xbf16>
    %cst = arith.constant dense<0.000000e+00> : vector<128x128xf32>
    %6 = tpu.matmul %4, %5, %cst {dimension_numbers = #tpu.dot_dimension_numbers<[1], [0], [0], [1], [0, 0, 1, 1], [], []>} : vector<128x128xbf16>, vector<128x128xbf16>, vector<128x128xf32> -> vector<128x128xf32>
    %7 = arith.addf %3, %6 : vector<128x128xf32>
    %c0_6 = arith.constant 0 : index
    %c0_7 = arith.constant 0 : index
    %8 = vector.load %arg7[%c0_6, %c0_7] : memref<128x128xf32, #tpu.memory_space<vmem>>, vector<128x128xf32>
    tpu.vector_store %arg7[%c0_6, %c0_7], %7 {strides = array<i32>} : memref<128x128xf32, #tpu.memory_space<vmem>>, vector<128x128xf32>,
    %c0_i32_8 = arith.constant 0 : i32
    %9 = arith.cmpi eq, %arg2, %c0_i32_8 : i32
    %10 = arith.extui %9 : i1 to i32
    %c0_i32_9 = arith.constant 0 : i32
    %11 = arith.cmpi ne, %10, %c0_i32_9 : i32
    scf.if %11 {
      %c0_10 = arith.constant 0 : index
      %c0_11 = arith.constant 0 : index
      %12 = vector.load %arg7[%c0_10, %c0_11] : memref<128x128xf32, #tpu.memory_space<vmem>>, vector<128x128xf32>
      %c0_12 = arith.constant 0 : index
      %c0_13 = arith.constant 0 : index
      %13 = vector.load %arg5[%c0_12, %c0_13] : memref<128x128xf32, #tpu.memory_space<vmem>>, vector<128x128xf32>
      tpu.vector_store %arg5[%c0_12, %c0_13], %12 {strides = array<i32>} : memref<128x128xf32, #tpu.memory_space<vmem>>, vector<128x128xf32>,
      %cst_14 = arith.constant dense<0.000000e+00> : vector<128xf32>
      %14 = vector.multi_reduction <add>, %12, %cst_14 [0] : vector<128x128xf32> to vector<128xf32>
      %15 = vector.shape_cast %14 : vector<128xf32> to vector<1x128xf32>
      %16 = arith.mulf %12, %12 : vector<128x128xf32>
      %cst_15 = arith.constant dense<0.000000e+00> : vector<128xf32>
      %17 = vector.multi_reduction <add>, %16, %cst_15 [0] : vector<128x128xf32> to vector<128xf32>
      %18 = vector.shape_cast %17 : vector<128xf32> to vector<1x128xf32>
      %cst_16 = arith.constant 0.000000e+00 : f32
      %19 = vector.broadcast %cst_16 : f32 to vector<6x128xf32>
      %20 = tpu.concatenate %15, %18, %19 in 0 : vector<1x128xf32>, vector<1x128xf32>, vector<6x128xf32> -> vector<8x128xf32>
      %21 = vector.shape_cast %20 : vector<8x128xf32> to vector<1x8x128xf32>
      %c0_17 = arith.constant 0 : index
      %c0_18 = arith.constant 0 : index
      %c0_19 = arith.constant 0 : index
      %22 = vector.load %arg6[%c0_17, %c0_18, %c0_19] : memref<1x8x128xf32, #tpu.memory_space<vmem>>, vector<1x8x128xf32>
      tpu.vector_store %arg6[%c0_17, %c0_18, %c0_19], %21 {strides = array<i32>} : memref<1x8x128xf32, #tpu.memory_space<vmem>>, vector<1x8x128xf32>,
    } else {
    }
    return
  }
  func.func @transform_0(%arg0: i32, %arg1: i32, %arg2: i32) -> (i32, i32) {
    %c0_i32 = arith.constant 0 : i32
    return %arg0, %arg2 : i32, i32
  }
  func.func @transform_1(%arg0: i32, %arg1: i32, %arg2: i32) -> (i32, i32) {
    %c0_i32 = arith.constant 0 : i32
    return %arg2, %arg1 : i32, i32
  }
  func.func @transform_2(%arg0: i32, %arg1: i32, %arg2: i32) -> (i32, i32) {
    %c0_i32 = arith.constant 0 : i32
    return %arg0, %arg1 : i32, i32
  }
  func.func @transform_3(%arg0: i32, %arg1: i32, %arg2: i32) -> (i32, i32, i32) {
    %c0_i32 = arith.constant 0 : i32
    %c0_i32_0 = arith.constant 0 : i32
    return %arg0, %c0_i32, %arg1 : i32, i32, i32
  }
}

module attributes {stable_mosaic.version = 11 : i64} {
  func.func @_gemm_stats_kernel(%arg0: i32, %arg1: i32, %arg2: i32, %arg3: memref<128x384xbf16, #tpu.memory_space<vmem>>, %arg4: memref<384x128xbf16, #tpu.memory_space<vmem>>, %arg5: memref<128x128xf32, #tpu.memory_space<vmem>>, %arg6: memref<1x8x128xf32, #tpu.memory_space<vmem>>, %arg7: memref<128x128xf32, #tpu.memory_space<vmem>>) attributes {dimension_semantics = [#tpu.dimension_semantics<parallel>, #tpu.dimension_semantics<parallel>, #tpu.dimension_semantics<arbitrary>], iteration_bounds = array<i64: 1, 1, 3>, scalar_prefetch = 0 : i64, scratch_operands = 1 : i64, tpu.core_type = #tpu.core_type<tc>, window_params = [{transform_indices = @transform_0, window_bounds = array<i64: 128, 384>}, {transform_indices = @transform_1, window_bounds = array<i64: 384, 128>}, {transform_indices = @transform_2, window_bounds = array<i64: 128, 128>}, {transform_indices = @transform_3, window_bounds = array<i64: 1, 8, 128>}]} {
    %c0_i32 = arith.constant 0 : i32
    %0 = arith.cmpi eq, %arg2, %c0_i32 : i32
    %1 = arith.extui %0 : i1 to i32
    %c0_i32_0 = arith.constant 0 : i32
    %2 = arith.cmpi ne, %1, %c0_i32_0 : i32
    scf.if %2 {
      %cst_9 = arith.constant 0.000000e+00 : f32
      %12 = vector.broadcast %cst_9 : f32 to vector<128x128xf32>
      %c0_10 = arith.constant 0 : index
      %c0_11 = arith.constant 0 : index
      %13 = vector.load %arg7[%c0_10, %c0_11] : memref<128x128xf32, #tpu.memory_space<vmem>>, vector<128x128xf32>
      tpu.vector_store %arg7[%c0_10, %c0_11], %12 {strides = array<i32>} : memref<128x128xf32, #tpu.memory_space<vmem>>, vector<128x128xf32>,
    } else {
    }
    %c0 = arith.constant 0 : index
    %c0_1 = arith.constant 0 : index
    %3 = vector.load %arg7[%c0, %c0_1] : memref<128x128xf32, #tpu.memory_space<vmem>>, vector<128x128xf32>
    %c0_2 = arith.constant 0 : index
    %c0_3 = arith.constant 0 : index
    %4 = vector.load %arg3[%c0_2, %c0_3] : memref<128x384xbf16, #tpu.memory_space<vmem>>, vector<128x384xbf16>
    %c0_4 = arith.constant 0 : index
    %c0_5 = arith.constant 0 : index
    %5 = vector.load %arg4[%c0_4, %c0_5] : memref<384x128xbf16, #tpu.memory_space<vmem>>, vector<384x128xbf16>
    %cst = arith.constant dense<0.000000e+00> : vector<128x128xf32>
    %6 = tpu.matmul %4, %5, %cst {dimension_numbers = #tpu.dot_dimension_numbers<[1], [0], [0], [1], [0, 0, 1, 1], [], []>} : vector<128x384xbf16>, vector<384x128xbf16>, vector<128x128xf32> -> vector<128x128xf32>
    %7 = arith.addf %3, %6 : vector<128x128xf32>
    %c0_6 = arith.constant 0 : index
    %c0_7 = arith.constant 0 : index
    %8 = vector.load %arg7[%c0_6, %c0_7] : memref<128x128xf32, #tpu.memory_space<vmem>>, vector<128x128xf32>
    tpu.vector_store %arg7[%c0_6, %c0_7], %7 {strides = array<i32>} : memref<128x128xf32, #tpu.memory_space<vmem>>, vector<128x128xf32>,
    %c2_i32 = arith.constant 2 : i32
    %9 = arith.cmpi eq, %arg2, %c2_i32 : i32
    %10 = arith.extui %9 : i1 to i32
    %c0_i32_8 = arith.constant 0 : i32
    %11 = arith.cmpi ne, %10, %c0_i32_8 : i32
    scf.if %11 {
      %c0_9 = arith.constant 0 : index
      %c0_10 = arith.constant 0 : index
      %12 = vector.load %arg7[%c0_9, %c0_10] : memref<128x128xf32, #tpu.memory_space<vmem>>, vector<128x128xf32>
      %c0_11 = arith.constant 0 : index
      %c0_12 = arith.constant 0 : index
      %13 = vector.load %arg5[%c0_11, %c0_12] : memref<128x128xf32, #tpu.memory_space<vmem>>, vector<128x128xf32>
      tpu.vector_store %arg5[%c0_11, %c0_12], %12 {strides = array<i32>} : memref<128x128xf32, #tpu.memory_space<vmem>>, vector<128x128xf32>,
      %cst_13 = arith.constant dense<0.000000e+00> : vector<128xf32>
      %14 = vector.multi_reduction <add>, %12, %cst_13 [0] : vector<128x128xf32> to vector<128xf32>
      %15 = vector.shape_cast %14 : vector<128xf32> to vector<1x128xf32>
      %16 = arith.mulf %12, %12 : vector<128x128xf32>
      %cst_14 = arith.constant dense<0.000000e+00> : vector<128xf32>
      %17 = vector.multi_reduction <add>, %16, %cst_14 [0] : vector<128x128xf32> to vector<128xf32>
      %18 = vector.shape_cast %17 : vector<128xf32> to vector<1x128xf32>
      %cst_15 = arith.constant 0.000000e+00 : f32
      %19 = vector.broadcast %cst_15 : f32 to vector<6x128xf32>
      %20 = tpu.concatenate %15, %18, %19 in 0 : vector<1x128xf32>, vector<1x128xf32>, vector<6x128xf32> -> vector<8x128xf32>
      %21 = vector.shape_cast %20 : vector<8x128xf32> to vector<1x8x128xf32>
      %c0_16 = arith.constant 0 : index
      %c0_17 = arith.constant 0 : index
      %c0_18 = arith.constant 0 : index
      %22 = vector.load %arg6[%c0_16, %c0_17, %c0_18] : memref<1x8x128xf32, #tpu.memory_space<vmem>>, vector<1x8x128xf32>
      tpu.vector_store %arg6[%c0_16, %c0_17, %c0_18], %21 {strides = array<i32>} : memref<1x8x128xf32, #tpu.memory_space<vmem>>, vector<1x8x128xf32>,
    } else {
    }
    return
  }
  func.func @transform_0(%arg0: i32, %arg1: i32, %arg2: i32) -> (i32, i32) {
    %c0_i32 = arith.constant 0 : i32
    return %arg0, %arg2 : i32, i32
  }
  func.func @transform_1(%arg0: i32, %arg1: i32, %arg2: i32) -> (i32, i32) {
    %c0_i32 = arith.constant 0 : i32
    return %arg2, %arg1 : i32, i32
  }
  func.func @transform_2(%arg0: i32, %arg1: i32, %arg2: i32) -> (i32, i32) {
    %c0_i32 = arith.constant 0 : i32
    return %arg0, %arg1 : i32, i32
  }
  func.func @transform_3(%arg0: i32, %arg1: i32, %arg2: i32) -> (i32, i32, i32) {
    %c0_i32 = arith.constant 0 : i32
    %c0_i32_0 = arith.constant 0 : i32
    return %arg0, %c0_i32, %arg1 : i32, i32, i32
  }
}

module attributes {stable_mosaic.version = 11 : i64} {
  func.func @_affine_kernel(%arg0: i32, %arg1: memref<128x128xf32, #tpu.memory_space<vmem>>, %arg2: memref<1x128xf32, #tpu.memory_space<vmem>>, %arg3: memref<1x128xf32, #tpu.memory_space<vmem>>, %arg4: memref<128x128xbf16, #tpu.memory_space<vmem>>) attributes {dimension_semantics = [#tpu.dimension_semantics<parallel>], iteration_bounds = array<i64: 1>, scalar_prefetch = 0 : i64, scratch_operands = 0 : i64, tpu.core_type = #tpu.core_type<tc>, window_params = [{transform_indices = @transform_0, window_bounds = array<i64: 128, 128>}, {pipeline_mode = #tpu.pipeline_mode<synchronous>, transform_indices = @transform_1, window_bounds = array<i64: 1, 128>}, {pipeline_mode = #tpu.pipeline_mode<synchronous>, transform_indices = @transform_2, window_bounds = array<i64: 1, 128>}, {transform_indices = @transform_3, window_bounds = array<i64: 128, 128>}]} {
    %c0 = arith.constant 0 : index
    %c0_0 = arith.constant 0 : index
    %0 = vector.load %arg1[%c0, %c0_0] : memref<128x128xf32, #tpu.memory_space<vmem>>, vector<128x128xf32>
    %c0_1 = arith.constant 0 : index
    %c0_2 = arith.constant 0 : index
    %1 = vector.load %arg2[%c0_1, %c0_2] : memref<1x128xf32, #tpu.memory_space<vmem>>, vector<1x128xf32>
    %2 = vector.broadcast %1 : vector<1x128xf32> to vector<128x128xf32>
    %3 = arith.mulf %0, %2 : vector<128x128xf32>
    %c0_3 = arith.constant 0 : index
    %c0_4 = arith.constant 0 : index
    %4 = vector.load %arg3[%c0_3, %c0_4] : memref<1x128xf32, #tpu.memory_space<vmem>>, vector<1x128xf32>
    %5 = vector.broadcast %4 : vector<1x128xf32> to vector<128x128xf32>
    %6 = arith.addf %3, %5 : vector<128x128xf32>
    %cst = arith.constant 0.000000e+00 : f32
    %7 = vector.broadcast %cst : f32 to vector<128x128xf32>
    %8 = arith.maximumf %6, %7 : vector<128x128xf32>
    %9 = arith.truncf %8 : vector<128x128xf32> to vector<128x128xbf16>
    %c0_5 = arith.constant 0 : index
    %c0_6 = arith.constant 0 : index
    %10 = vector.load %arg4[%c0_5, %c0_6] : memref<128x128xbf16, #tpu.memory_space<vmem>>, vector<128x128xbf16>
    tpu.vector_store %arg4[%c0_5, %c0_6], %9 {strides = array<i32>} : memref<128x128xbf16, #tpu.memory_space<vmem>>, vector<128x128xbf16>,
    return
  }
  func.func @transform_0(%arg0: i32) -> (i32, i32) {
    %c0_i32 = arith.constant 0 : i32
    %c0_i32_0 = arith.constant 0 : i32
    return %arg0, %c0_i32 : i32, i32
  }
  func.func @transform_1(%arg0: i32) -> (i32, i32) {
    %c0_i32 = arith.constant 0 : i32
    %c0_i32_0 = arith.constant 0 : i32
    %c0_i32_1 = arith.constant 0 : i32
    return %c0_i32, %c0_i32_0 : i32, i32
  }
  func.func @transform_2(%arg0: i32) -> (i32, i32) {
    %c0_i32 = arith.constant 0 : i32
    %c0_i32_0 = arith.constant 0 : i32
    %c0_i32_1 = arith.constant 0 : i32
    return %c0_i32, %c0_i32_0 : i32, i32
  }
  func.func @transform_3(%arg0: i32) -> (i32, i32) {
    %c0_i32 = arith.constant 0 : i32
    %c0_i32_0 = arith.constant 0 : i32
    return %arg0, %c0_i32 : i32, i32
  }
}

module attributes {stable_mosaic.version = 11 : i64} {
  func.func @_bn2_add_relu_kernel(%arg0: i32, %arg1: memref<128x128xf32, #tpu.memory_space<vmem>>, %arg2: memref<128x128xf32, #tpu.memory_space<vmem>>, %arg3: memref<1x128xf32, #tpu.memory_space<vmem>>, %arg4: memref<1x128xf32, #tpu.memory_space<vmem>>, %arg5: memref<1x128xf32, #tpu.memory_space<vmem>>, %arg6: memref<1x128xf32, #tpu.memory_space<vmem>>, %arg7: memref<128x128xf32, #tpu.memory_space<vmem>>) attributes {dimension_semantics = [#tpu.dimension_semantics<parallel>], iteration_bounds = array<i64: 1>, scalar_prefetch = 0 : i64, scratch_operands = 0 : i64, tpu.core_type = #tpu.core_type<tc>, window_params = [{transform_indices = @transform_0, window_bounds = array<i64: 128, 128>}, {transform_indices = @transform_1, window_bounds = array<i64: 128, 128>}, {pipeline_mode = #tpu.pipeline_mode<synchronous>, transform_indices = @transform_2, window_bounds = array<i64: 1, 128>}, {pipeline_mode = #tpu.pipeline_mode<synchronous>, transform_indices = @transform_3, window_bounds = array<i64: 1, 128>}, {pipeline_mode = #tpu.pipeline_mode<synchronous>, transform_indices = @transform_4, window_bounds = array<i64: 1, 128>}, {pipeline_mode = #tpu.pipeline_mode<synchronous>, transform_indices = @transform_5, window_bounds = array<i64: 1, 128>}, {transform_indices = @transform_6, window_bounds = array<i64: 128, 128>}]} {
    %c0 = arith.constant 0 : index
    %c0_0 = arith.constant 0 : index
    %0 = vector.load %arg1[%c0, %c0_0] : memref<128x128xf32, #tpu.memory_space<vmem>>, vector<128x128xf32>
    %c0_1 = arith.constant 0 : index
    %c0_2 = arith.constant 0 : index
    %1 = vector.load %arg3[%c0_1, %c0_2] : memref<1x128xf32, #tpu.memory_space<vmem>>, vector<1x128xf32>
    %2 = vector.broadcast %1 : vector<1x128xf32> to vector<128x128xf32>
    %3 = arith.mulf %0, %2 : vector<128x128xf32>
    %c0_3 = arith.constant 0 : index
    %c0_4 = arith.constant 0 : index
    %4 = vector.load %arg4[%c0_3, %c0_4] : memref<1x128xf32, #tpu.memory_space<vmem>>, vector<1x128xf32>
    %5 = vector.broadcast %4 : vector<1x128xf32> to vector<128x128xf32>
    %6 = arith.addf %3, %5 : vector<128x128xf32>
    %c0_5 = arith.constant 0 : index
    %c0_6 = arith.constant 0 : index
    %7 = vector.load %arg2[%c0_5, %c0_6] : memref<128x128xf32, #tpu.memory_space<vmem>>, vector<128x128xf32>
    %c0_7 = arith.constant 0 : index
    %c0_8 = arith.constant 0 : index
    %8 = vector.load %arg5[%c0_7, %c0_8] : memref<1x128xf32, #tpu.memory_space<vmem>>, vector<1x128xf32>
    %9 = vector.broadcast %8 : vector<1x128xf32> to vector<128x128xf32>
    %10 = arith.mulf %7, %9 : vector<128x128xf32>
    %c0_9 = arith.constant 0 : index
    %c0_10 = arith.constant 0 : index
    %11 = vector.load %arg6[%c0_9, %c0_10] : memref<1x128xf32, #tpu.memory_space<vmem>>, vector<1x128xf32>
    %12 = vector.broadcast %11 : vector<1x128xf32> to vector<128x128xf32>
    %13 = arith.addf %10, %12 : vector<128x128xf32>
    %14 = arith.addf %6, %13 : vector<128x128xf32>
    %cst = arith.constant 0.000000e+00 : f32
    %15 = vector.broadcast %cst : f32 to vector<128x128xf32>
    %16 = arith.maximumf %14, %15 : vector<128x128xf32>
    %c0_11 = arith.constant 0 : index
    %c0_12 = arith.constant 0 : index
    %17 = vector.load %arg7[%c0_11, %c0_12] : memref<128x128xf32, #tpu.memory_space<vmem>>, vector<128x128xf32>
    tpu.vector_store %arg7[%c0_11, %c0_12], %16 {strides = array<i32>} : memref<128x128xf32, #tpu.memory_space<vmem>>, vector<128x128xf32>,
    return
  }
  func.func @transform_0(%arg0: i32) -> (i32, i32) {
    %c0_i32 = arith.constant 0 : i32
    %c0_i32_0 = arith.constant 0 : i32
    return %arg0, %c0_i32 : i32, i32
  }
  func.func @transform_1(%arg0: i32) -> (i32, i32) {
    %c0_i32 = arith.constant 0 : i32
    %c0_i32_0 = arith.constant 0 : i32
    return %arg0, %c0_i32 : i32, i32
  }
  func.func @transform_2(%arg0: i32) -> (i32, i32) {
    %c0_i32 = arith.constant 0 : i32
    %c0_i32_0 = arith.constant 0 : i32
    %c0_i32_1 = arith.constant 0 : i32
    return %c0_i32, %c0_i32_0 : i32, i32
  }
  func.func @transform_3(%arg0: i32) -> (i32, i32) {
    %c0_i32 = arith.constant 0 : i32
    %c0_i32_0 = arith.constant 0 : i32
    %c0_i32_1 = arith.constant 0 : i32
    return %c0_i32, %c0_i32_0 : i32, i32
  }
  func.func @transform_4(%arg0: i32) -> (i32, i32) {
    %c0_i32 = arith.constant 0 : i32
    %c0_i32_0 = arith.constant 0 : i32
    %c0_i32_1 = arith.constant 0 : i32
    return %c0_i32, %c0_i32_0 : i32, i32
  }
  func.func @transform_5(%arg0: i32) -> (i32, i32) {
    %c0_i32 = arith.constant 0 : i32
    %c0_i32_0 = arith.constant 0 : i32
    %c0_i32_1 = arith.constant 0 : i32
    return %c0_i32, %c0_i32_0 : i32, i32
  }
  func.func @transform_6(%arg0: i32) -> (i32, i32) {
    %c0_i32 = arith.constant 0 : i32
    %c0_i32_0 = arith.constant 0 : i32
    return %arg0, %c0_i32 : i32, i32
  }
}

</mosaic_0001>

<llo_original>
// kernel: basic_block_forward.8
$region0: #{basic_block_forward.8}
  #allocation0 [shape = 'u32[]', space=smem, size = 0x4, offset = 0x4, fixed_abs, tag = 'smem constant byte address 0x4 - core index']
  #allocation1 [shape = 'u32[144,128]{1,0:T(1,128)}', space=vmem, size = 0x12000, scoped, tag = 'internal scratch']
  #allocation2 [shape = 'f32[128,128]{1,0:T(8,128)}', space=vmem, size = 0x10000, scoped, tag = 'scratch operand']
  %s0 = inlined_call_operand.vmem [shape: bf16[128,128], index: 0, kind: input, shape index: {}]
  %s1 = inlined_call_operand.vmem [shape: bf16[128,128], index: 1, kind: input, shape index: {}]
  %s2 = inlined_call_operand.vmem [shape: f32[128,128], index: 2, kind: output, shape index: {0}]
  %s3 = inlined_call_operand.vmem [shape: f32[1,8,128], index: 3, kind: output, shape index: {1}]
  %4 = xla_tuple %s2, %s3
  %s5 = sld [smem:[#allocation0]]
  $region34: #{basic_block_forward.8} parent=0
    _
  %s7 = ssub.s32 1, %s5
  %s8 = scalar_select 0, %s7, %s5
  // Predicated region
  $region2: #{basic_block_forward.8} parent=0 // pred_check
    _
  $region3: #{basic_block_forward.8} parent=0 // pred_check_branch
    %10 = sbr.rel (0) target = $region5
  $region4: #{basic_block_forward.8} parent=0 // pred_region
    _
  $region5: #{basic_block_forward.8} parent=0 // pred_fallthru
    _
  // Predicated region
  $region6: #{basic_block_forward.8} parent=0 // pred_check
    _
  $region7: #{basic_block_forward.8} parent=0 // pred_check_branch
    %12 = sbr.rel (0) target = $region9
  $region8: #{basic_block_forward.8} parent=0 // pred_region
    _
  $region9: #{basic_block_forward.8} parent=0 // pred_fallthru
    _
  %p14 = scmp.eq.s32.totalorder 0, 0
  // Predicated region
  $region10: #{basic_block_forward.8} parent=0 // pred_check
    %p15 = pneg %p14
  $region11: #{basic_block_forward.8} parent=0 // pred_check_branch
    %17 = sbr.rel (%p15) target = $region13
  $region12: #{basic_block_forward.8} parent=0 // pred_region
    %18 = vst [vmem:[#allocation2] sm:$0xff] 0.0
    %19 = vst [vmem:[#allocation2 + $0x8] sm:$0xff] 0.0
    %20 = vst [vmem:[#allocation2 + $0x10] sm:$0xff] 0.0
    %21 = vst [vmem:[#allocation2 + $0x18] sm:$0xff] 0.0
    %22 = vst [vmem:[#allocation2 + $0x20] sm:$0xff] 0.0
    %23 = vst [vmem:[#allocation2 + $0x28] sm:$0xff] 0.0
    %24 = vst [vmem:[#allocation2 + $0x30] sm:$0xff] 0.0
    %25 = vst [vmem:[#allocation2 + $0x38] sm:$0xff] 0.0
    %26 = vst [vmem:[#allocation2 + $0x40] sm:$0xff] 0.0
    %27 = vst [vmem:[#allocation2 + $0x48] sm:$0xff] 0.0
    %28 = vst [vmem:[#allocation2 + $0x50] sm:$0xff] 0.0
    %29 = vst [vmem:[#allocation2 + $0x58] sm:$0xff] 0.0
    %30 = vst [vmem:[#allocation2 + $0x60] sm:$0xff] 0.0
    %31 = vst [vmem:[#allocation2 + $0x68] sm:$0xff] 0.0
    %32 = vst [vmem:[#allocation2 + $0x70] sm:$0xff] 0.0
    %33 = vst [vmem:[#allocation2 + $0x78] sm:$0xff] 0.0
  $region13: #{basic_block_forward.8} parent=0 // pred_fallthru
    _
  %v34 = vld [vmem:[#allocation2] sm:$0xff]
  %v35 = vld [vmem:[#allocation2 + $0x8] sm:$0xff]
  %v36 = vld [vmem:[#allocation2 + $0x10] sm:$0xff]
  %v37 = vld [vmem:[#allocation2 + $0x18] sm:$0xff]
  %v38 = vld [vmem:[#allocation2 + $0x20] sm:$0xff]
  %v39 = vld [vmem:[#allocation2 + $0x28] sm:$0xff]
  %v40 = vld [vmem:[#allocation2 + $0x30] sm:$0xff]
  %v41 = vld [vmem:[#allocation2 + $0x38] sm:$0xff]
  %v42 = vld [vmem:[#allocation2 + $0x40] sm:$0xff]
  %v43 = vld [vmem:[#allocation2 + $0x48] sm:$0xff]
  %v44 = vld [vmem:[#allocation2 + $0x50] sm:$0xff]
  %v45 = vld [vmem:[#allocation2 + $0x58] sm:$0xff]
  %v46 = vld [vmem:[#allocation2 + $0x60] sm:$0xff]
  %v47 = vld [vmem:[#allocation2 + $0x68] sm:$0xff]
  %v48 = vld [vmem:[#allocation2 + $0x70] sm:$0xff]
  %v49 = vld [vmem:[#allocation2 + $0x78] sm:$0xff]
  %v50 = vld [vmem:[%s0] sm:$0xf]
  %v51 = vld [vmem:[%s0 + $0x4] sm:$0xf]
  %v52 = vld [vmem:[%s0 + $0x8] sm:$0xf]
  %v53 = vld [vmem:[%s0 + $0xc] sm:$0xf]
  %v54 = vld [vmem:[%s0 + $0x10] sm:$0xf]
  %v55 = vld [vmem:[%s0 + $0x14] sm:$0xf]
  %v56 = vld [vmem:[%s0 + $0x18] sm:$0xf]
  %v57 = vld [vmem:[%s0 + $0x1c] sm:$0xf]
  %v58 = vld [vmem:[%s0 + $0x20] sm:$0xf]
  %v59 = vld [vmem:[%s0 + $0x24] sm:$0xf]
  %v60 = vld [vmem:[%s0 + $0x28] sm:$0xf]
  %v61 = vld [vmem:[%s0 + $0x2c] sm:$0xf]
  %v62 = vld [vmem:[%s0 + $0x30] sm:$0xf]
  %v63 = vld [vmem:[%s0 + $0x34] sm:$0xf]
  %v64 = vld [vmem:[%s0 + $0x38] sm:$0xf]
  %v65 = vld [vmem:[%s0 + $0x3c] sm:$0xf]
  %v66 = vld [vmem:[%s1] sm:$0xf]
  %v67 = vld [vmem:[%s1 + $0x4] sm:$0xf]
  %v68 = vld [vmem:[%s1 + $0x8] sm:$0xf]
  %v69 = vld [vmem:[%s1 + $0xc] sm:$0xf]
  %v70 = vld [vmem:[%s1 + $0x10] sm:$0xf]
  %v71 = vld [vmem:[%s1 + $0x14] sm:$0xf]
  %v72 = vld [vmem:[%s1 + $0x18] sm:$0xf]
  %v73 = vld [vmem:[%s1 + $0x1c] sm:$0xf]
  %v74 = vld [vmem:[%s1 + $0x20] sm:$0xf]
  %v75 = vld [vmem:[%s1 + $0x24] sm:$0xf]
  %v76 = vld [vmem:[%s1 + $0x28] sm:$0xf]
  %v77 = vld [vmem:[%s1 + $0x2c] sm:$0xf]
  %v78 = vld [vmem:[%s1 + $0x30] sm:$0xf]
  %v79 = vld [vmem:[%s1 + $0x34] sm:$0xf]
  %v80 = vld [vmem:[%s1 + $0x38] sm:$0xf]
  %v81 = vld [vmem:[%s1 + $0x3c] sm:$0xf]
  %v98 = vunpack.c.l.b16 %v50
  %v99 = vunpack.c.l.b16 %v51
  %v100 = vunpack.c.l.b16 %v52
  %v101 = vunpack.c.l.b16 %v53
  %v102 = vunpack.c.l.b16 %v54
  %v103 = vunpack.c.l.b16 %v55
  %v104 = vunpack.c.l.b16 %v56
  %v105 = vunpack.c.l.b16 %v57
  %v106 = vunpack.c.l.b16 %v58
  %v107 = vunpack.c.l.b16 %v59
  %v108 = vunpack.c.l.b16 %v60
  %v109 = vunpack.c.l.b16 %v61
  %v110 = vunpack.c.l.b16 %v62
  %v111 = vunpack.c.l.b16 %v63
  %v112 = vunpack.c.l.b16 %v64
  %v113 = vunpack.c.l.b16 %v65
  %v114 = vpack.c.b16 %v99, %v98
  %v115 = vpack.c.b16 %v101, %v100
  %v116 = vpack.c.b16 %v103, %v102
  %v117 = vpack.c.b16 %v105, %v104
  %v118 = vpack.c.b16 %v107, %v106
  %v119 = vpack.c.b16 %v109, %v108
  %v120 = vpack.c.b16 %v111, %v110
  %v121 = vpack.c.b16 %v113, %v112
  %v146 = vunpack.c.l.b16 %v66
  %v147 = vunpack.c.l.b16 %v67
  %v148 = vunpack.c.l.b16 %v68
  %v149 = vunpack.c.l.b16 %v69
  %v150 = vunpack.c.l.b16 %v70
  %v151 = vunpack.c.l.b16 %v71
  %v152 = vunpack.c.l.b16 %v72
  %v153 = vunpack.c.l.b16 %v73
  %v154 = vunpack.c.l.b16 %v74
  %v155 = vunpack.c.l.b16 %v75
  %v156 = vunpack.c.l.b16 %v76
  %v157 = vunpack.c.l.b16 %v77
  %v158 = vunpack.c.l.b16 %v78
  %v159 = vunpack.c.l.b16 %v79
  %v160 = vunpack.c.l.b16 %v80
  %v161 = vunpack.c.l.b16 %v81
  %v162 = vpack.c.b16 %v147, %v146
  %v163 = vpack.c.b16 %v149, %v148
  %v164 = vpack.c.b16 %v151, %v150
  %v165 = vpack.c.b16 %v153, %v152
  %v166 = vpack.c.b16 %v155, %v154
  %v167 = vpack.c.b16 %v157, %v156
  %v168 = vpack.c.b16 %v159, %v158
  %v169 = vpack.c.b16 %v161, %v160
  %178 = vmatprep.subr.bf16.mxu0 0
  %179 = vmatpush1.bf16.msra.mxu0 %v162
  %180 = vmatprep.subr.bf16.mxu0 0
  %181 = vmatpush1.bf16.msra.mxu0 %v163
  %182 = vmatprep.subr.bf16.mxu0 0
  %183 = vmatpush1.bf16.msra.mxu0 %v164
  %184 = vmatprep.subr.bf16.mxu0 0
  %185 = vmatpush1.bf16.msra.mxu0 %v165
  %186 = vmatprep.subr.bf16.mxu0 0
  %187 = vmatpush1.bf16.msra.mxu0 %v166
  %188 = vmatprep.subr.bf16.mxu0 0
  %189 = vmatpush1.bf16.msra.mxu0 %v167
  %190 = vmatprep.subr.bf16.mxu0 0
  %191 = vmatpush1.bf16.msra.mxu0 %v168
  %192 = vmatprep.subr.bf16.mxu0 0
  %193 = vmatpush1.bf16.msra.mxu0 %v169
  %194 = vmatprep.subr.bf16.mxu0 0
  %195 = vmatpush1.bf16.msra.mxu0 0
  %196 = vmatprep.subr.bf16.mxu0 0
  %197 = vmatpush1.bf16.msra.mxu0 0
  %198 = vmatprep.subr.bf16.mxu0 0
  %199 = vmatpush1.bf16.msra.mxu0 0
  %200 = vmatprep.subr.bf16.mxu0 0
  %201 = vmatpush1.bf16.msra.mxu0 0
  %202 = vmatprep.subr.bf16.mxu0 0
  %203 = vmatpush1.bf16.msra.mxu0 0
  %204 = vmatprep.subr.bf16.mxu0 0
  %205 = vmatpush1.bf16.msra.mxu0 0
  %206 = vmatprep.subr.bf16.mxu0 0
  %207 = vmatpush1.bf16.msra.mxu0 0
  %208 = vmatprep.subr.bf16.mxu0 0
  %209 = vmatpush1.bf16.msra.mxu0 0
  %210 = vmatprep.mubr.bf16.mxu0 0
  %211 = vmatmul.mubr.bf16.gmra.mrb[0].mxu0 %v114
  %v212 = vpop.f32.mrb[0].mxu0
  %v213 = vadd.f32 0.0, %v212
  %v214 = vpop.f32.mrb[0].mxu0
  %v215 = vpop.f32.mrb[0].mxu0
  %v216 = vadd.f32 0.0, %v215
  %v217 = vpop.f32.mrb[0].mxu0
  %218 = vmatprep.mubr.bf16.mxu0 0
  %219 = vmatmul.mubr.bf16.gmra.mrb[0].mxu0 %v115
  %v220 = vpop.f32.mrb[0].mxu0
  %v221 = vadd.f32 0.0, %v220
  %v222 = vpop.f32.mrb[0].mxu0
  %v223 = vpop.f32.mrb[0].mxu0
  %v224 = vadd.f32 0.0, %v223
  %v225 = vpop.f32.mrb[0].mxu0
  %226 = vmatprep.mubr.bf16.mxu0 0
  %227 = vmatmul.mubr.bf16.gmra.mrb[0].mxu0 %v116
  %v228 = vpop.f32.mrb[0].mxu0
  %v229 = vadd.f32 0.0, %v228
  %v230 = vpop.f32.mrb[0].mxu0
  %v231 = vpop.f32.mrb[0].mxu0
  %v232 = vadd.f32 0.0, %v231
  %v233 = vpop.f32.mrb[0].mxu0
  %234 = vmatprep.mubr.bf16.mxu0 0
  %235 = vmatmul.mubr.bf16.gmra.mrb[0].mxu0 %v117
  %v236 = vpop.f32.mrb[0].mxu0
  %v237 = vadd.f32 0.0, %v236
  %v238 = vpop.f32.mrb[0].mxu0
  %v239 = vpop.f32.mrb[0].mxu0
  %v240 = vadd.f32 0.0, %v239
  %v241 = vpop.f32.mrb[0].mxu0
  %242 = vmatprep.mubr.bf16.mxu0 0
  %243 = vmatmul.mubr.bf16.gmra.mrb[0].mxu0 %v118
  %v244 = vpop.f32.mrb[0].mxu0
  %v245 = vadd.f32 0.0, %v244
  %v246 = vpop.f32.mrb[0].mxu0
  %v247 = vpop.f32.mrb[0].mxu0
  %v248 = vadd.f32 0.0, %v247
  %v249 = vpop.f32.mrb[0].mxu0
  %250 = vmatprep.mubr.bf16.mxu0 0
  %251 = vmatmul.mubr.bf16.gmra.mrb[0].mxu0 %v119
  %v252 = vpop.f32.mrb[0].mxu0
  %v253 = vadd.f32 0.0, %v252
  %v254 = vpop.f32.mrb[0].mxu0
  %v255 = vpop.f32.mrb[0].mxu0
  %v256 = vadd.f32 0.0, %v255
  %v257 = vpop.f32.mrb[0].mxu0
  %258 = vmatprep.mubr.bf16.mxu0 0
  %259 = vmatmul.mubr.bf16.gmra.mrb[0].mxu0 %v120
  %v260 = vpop.f32.mrb[0].mxu0
  %v261 = vadd.f32 0.0, %v260
  %v262 = vpop.f32.mrb[0].mxu0
  %v263 = vpop.f32.mrb[0].mxu0
  %v264 = vadd.f32 0.0, %v263
  %v265 = vpop.f32.mrb[0].mxu0
  %266 = vmatprep.mubr.bf16.mxu0 0
  %267 = vmatmul.mubr.bf16.gmra.mrb[0].mxu0 %v121
  %v268 = vpop.f32.mrb[0].mxu0
  %v269 = vadd.f32 0.0, %v268
  %v270 = vpop.f32.mrb[0].mxu0
  %v271 = vpop.f32.mrb[0].mxu0
  %v272 = vadd.f32 0.0, %v271
  %v273 = vpop.f32.mrb[0].mxu0
  %274 = vdwg.mxu0
  %v275 = vadd.f32 %v34, %v213
  %v276 = vadd.f32 %v35, %v216
  %v277 = vadd.f32 %v36, %v221
  %v278 = vadd.f32 %v37, %v224
  %v279 = vadd.f32 %v38, %v229
  %v280 = vadd.f32 %v39, %v232
  %v281 = vadd.f32 %v40, %v237
  %v282 = vadd.f32 %v41, %v240
  %v283 = vadd.f32 %v42, %v245
  %v284 = vadd.f32 %v43, %v248
  %v285 = vadd.f32 %v44, %v253
  %v286 = vadd.f32 %v45, %v256
  %v287 = vadd.f32 %v46, %v261
  %v288 = vadd.f32 %v47, %v264
  %v289 = vadd.f32 %v48, %v269
  %v290 = vadd.f32 %v49, %v272
  %291 = vst [vmem:[#allocation2] sm:$0xff] %v275
  %292 = vst [vmem:[#allocation2 + $0x8] sm:$0xff] %v276
  %293 = vst [vmem:[#allocation2 + $0x10] sm:$0xff] %v277
  %294 = vst [vmem:[#allocation2 + $0x18] sm:$0xff] %v278
  %295 = vst [vmem:[#allocation2 + $0x20] sm:$0xff] %v279
  %296 = vst [vmem:[#allocation2 + $0x28] sm:$0xff] %v280
  %297 = vst [vmem:[#allocation2 + $0x30] sm:$0xff] %v281
  %298 = vst [vmem:[#allocation2 + $0x38] sm:$0xff] %v282
  %299 = vst [vmem:[#allocation2 + $0x40] sm:$0xff] %v283
  %300 = vst [vmem:[#allocation2 + $0x48] sm:$0xff] %v284
  %301 = vst [vmem:[#allocation2 + $0x50] sm:$0xff] %v285
  %302 = vst [vmem:[#allocation2 + $0x58] sm:$0xff] %v286
  %303 = vst [vmem:[#allocation2 + $0x60] sm:$0xff] %v287
  %304 = vst [vmem:[#allocation2 + $0x68] sm:$0xff] %v288
  %305 = vst [vmem:[#allocation2 + $0x70] sm:$0xff] %v289
  %306 = vst [vmem:[#allocation2 + $0x78] sm:$0xff] %v290
  // Predicated region
  $region14: #{basic_block_forward.8} parent=0 // pred_check
    %p307 = pneg %p14
  $region15: #{basic_block_forward.8} parent=0 // pred_check_branch
    %309 = sbr.rel (%p307) target = $region17
  $region16: #{basic_block_forward.8} parent=0 // pred_region
    %v310 = vld [vmem:[#allocation2] sm:$0xff]
    %v311 = vld [vmem:[#allocation2 + $0x8] sm:$0xff]
    %v312 = vld [vmem:[#allocation2 + $0x10] sm:$0xff]
    %v313 = vld [vmem:[#allocation2 + $0x18] sm:$0xff]
    %v314 = vld [vmem:[#allocation2 + $0x20] sm:$0xff]
    %v315 = vld [vmem:[#allocation2 + $0x28] sm:$0xff]
    %v316 = vld [vmem:[#allocation2 + $0x30] sm:$0xff]
    %v317 = vld [vmem:[#allocation2 + $0x38] sm:$0xff]
    %v318 = vld [vmem:[#allocation2 + $0x40] sm:$0xff]
    %v319 = vld [vmem:[#allocation2 + $0x48] sm:$0xff]
    %v320 = vld [vmem:[#allocation2 + $0x50] sm:$0xff]
    %v321 = vld [vmem:[#allocation2 + $0x58] sm:$0xff]
    %v322 = vld [vmem:[#allocation2 + $0x60] sm:$0xff]
    %v323 = vld [vmem:[#allocation2 + $0x68] sm:$0xff]
    %v324 = vld [vmem:[#allocation2 + $0x70] sm:$0xff]
    %v325 = vld [vmem:[#allocation2 + $0x78] sm:$0xff]
    %326 = vst [vmem:[%s2] sm:$0xff] %v310
    %327 = vst [vmem:[%s2 + $0x8] sm:$0xff] %v311
    %328 = vst [vmem:[%s2 + $0x10] sm:$0xff] %v312
    %329 = vst [vmem:[%s2 + $0x18] sm:$0xff] %v313
    %330 = vst [vmem:[%s2 + $0x20] sm:$0xff] %v314
    %331 = vst [vmem:[%s2 + $0x28] sm:$0xff] %v315
    %332 = vst [vmem:[%s2 + $0x30] sm:$0xff] %v316
    %333 = vst [vmem:[%s2 + $0x38] sm:$0xff] %v317
    %334 = vst [vmem:[%s2 + $0x40] sm:$0xff] %v318
    %335 = vst [vmem:[%s2 + $0x48] sm:$0xff] %v319
    %336 = vst [vmem:[%s2 + $0x50] sm:$0xff] %v320
    %337 = vst [vmem:[%s2 + $0x58] sm:$0xff] %v321
    %338 = vst [vmem:[%s2 + $0x60] sm:$0xff] %v322
    %339 = vst [vmem:[%s2 + $0x68] sm:$0xff] %v323
    %340 = vst [vmem:[%s2 + $0x70] sm:$0xff] %v324
    %341 = vst [vmem:[%s2 + $0x78] sm:$0xff] %v325
    %v342 = vadd.f32 %v310, %v311
    %v343 = vadd.f32 %v342, %v312
    %v344 = vadd.f32 %v343, %v313
    %v345 = vadd.f32 %v344, %v314
    %v346 = vadd.f32 %v345, %v315
    %v347 = vadd.f32 %v346, %v316
    %v348 = vadd.f32 %v347, %v317
    %v349 = vadd.f32 %v348, %v318
    %v350 = vadd.f32 %v349, %v319
    %v351 = vadd.f32 %v350, %v320
    %v352 = vadd.f32 %v351, %v321
    %v353 = vadd.f32 %v352, %v322
    %v354 = vadd.f32 %v353, %v323
    %v355 = vadd.f32 %v354, %v324
    %v356 = vadd.f32 %v355, %v325
    %v357 = vrot.slane %v356, 4
    %v358 = vadd.f32 %v356, %v357
    %v359 = vrot.slane %v358, 2
    %v360 = vadd.f32 %v358, %v359
    %v361 = vrot.slane %v360, 1
    %v362 = vadd.f32 %v360, %v361
    %v363 = vmul.f32 %v310, %v310
    %v364 = vmul.f32 %v311, %v311
    %v365 = vmul.f32 %v312, %v312
    %v366 = vmul.f32 %v313, %v313
    %v367 = vmul.f32 %v314, %v314
    %v368 = vmul.f32 %v315, %v315
    %v369 = vmul.f32 %v316, %v316
    %v370 = vmul.f32 %v317, %v317
    %v371 = vmul.f32 %v318, %v318
    %v372 = vmul.f32 %v319, %v319
    %v373 = vmul.f32 %v320, %v320
    %v374 = vmul.f32 %v321, %v321
    %v375 = vmul.f32 %v322, %v322
    %v376 = vmul.f32 %v323, %v323
    %v377 = vmul.f32 %v324, %v324
    %v378 = vmul.f32 %v325, %v325
    %v379 = vadd.f32 %v363, %v364
    %v380 = vadd.f32 %v379, %v365
    %v381 = vadd.f32 %v380, %v366
    %v382 = vadd.f32 %v381, %v367
    %v383 = vadd.f32 %v382, %v368
    %v384 = vadd.f32 %v383, %v369
    %v385 = vadd.f32 %v384, %v370
    %v386 = vadd.f32 %v385, %v371
    %v387 = vadd.f32 %v386, %v372
    %v388 = vadd.f32 %v387, %v373
    %v389 = vadd.f32 %v388, %v374
    %v390 = vadd.f32 %v389, %v375
    %v391 = vadd.f32 %v390, %v376
    %v392 = vadd.f32 %v391, %v377
    %v393 = vadd.f32 %v392, %v378
    %v394 = vrot.slane %v393, 4
    %v395 = vadd.f32 %v393, %v394
    %v396 = vrot.slane %v395, 2
    %v397 = vadd.f32 %v395, %v396
    %v398 = vrot.slane %v397, 1
    %v399 = vadd.f32 %v397, %v398
    %vm400 = vcmask 1040384
    %v401 = vsel %vm400, %v362, %v399
    %vm402 = vcmask 1041408
    %v403 = vsel %vm402, %v401, 0.0
    %404 = vst [vmem:[%s3] sm:$0xff] %v403
  $region17: #{basic_block_forward.8} parent=0 // pred_fallthru
    _
  // Predicated region
  $region18: #{basic_block_forward.8} parent=0 // pred_check
    _
  $region19: #{basic_block_forward.8} parent=0 // pred_check_branch
    %406 = sbr.rel (0) target = $region21
  $region20: #{basic_block_forward.8} parent=0 // pred_region
    _
  $region21: #{basic_block_forward.8} parent=0 // pred_fallthru
    _
  // Predicated region
  $region22: #{basic_block_forward.8} parent=0 // pred_check
    _
  $region23: #{basic_block_forward.8} parent=0 // pred_check_branch
    %408 = sbr.rel (0) target = $region25
  $region24: #{basic_block_forward.8} parent=0 // pred_region
    _
  $region25: #{basic_block_forward.8} parent=0 // pred_fallthru
    _
  // Predicated region
  $region26: #{basic_block_forward.8} parent=0 // pred_check
    _
  $region27: #{basic_block_forward.8} parent=0 // pred_check_branch
    %410 = sbr.rel (0) target = $region29
  $region28: #{basic_block_forward.8} parent=0 // pred_region
    _
  $region29: #{basic_block_forward.8} parent=0 // pred_fallthru
    _
  // Predicated region
  $region30: #{basic_block_forward.8} parent=0 // pred_check
    _
  $region31: #{basic_block_forward.8} parent=0 // pred_check_branch
    %412 = sbr.rel (0) target = $region33
  $region32: #{basic_block_forward.8} parent=0 // pred_region
    _
  $region33: #{basic_block_forward.8} parent=0 // pred_fallthru
    _

// kernel: basic_block_forward.6
$region0: #{basic_block_forward.6}
  #allocation0 [shape = 'u32[]', space=smem, size = 0x4, offset = 0x4, fixed_abs, tag = 'smem constant byte address 0x4 - core index']
  #allocation1 [shape = 'u32[144,128]{1,0:T(1,128)}', space=vmem, size = 0x12000, scoped, tag = 'internal scratch']
  %s0 = inlined_call_operand.vmem [shape: f32[128,128], index: 0, kind: input, shape index: {}]
  %s1 = inlined_call_operand.vmem [shape: f32[1,128], index: 1, kind: input, shape index: {}]
  %s2 = inlined_call_operand.vmem [shape: f32[1,128], index: 2, kind: input, shape index: {}]
  %s3 = inlined_call_operand.vmem [shape: bf16[128,128], index: 3, kind: output, shape index: {}]
  %s4 = sld [smem:[#allocation0]]
  $region22: #{basic_block_forward.6} parent=0
    _
  %s6 = ssub.s32 1, %s4
  %s7 = scalar_select 0, %s6, %s4
  // Predicated region
  $region2: #{basic_block_forward.6} parent=0 // pred_check
    _
  $region3: #{basic_block_forward.6} parent=0 // pred_check_branch
    %9 = sbr.rel (0) target = $region5
  $region4: #{basic_block_forward.6} parent=0 // pred_region
    _
  $region5: #{basic_block_forward.6} parent=0 // pred_fallthru
    _
  // Predicated region
  $region6: #{basic_block_forward.6} parent=0 // pred_check
    _
  $region7: #{basic_block_forward.6} parent=0 // pred_check_branch
    %11 = sbr.rel (0) target = $region9
  $region8: #{basic_block_forward.6} parent=0 // pred_region
    _
  $region9: #{basic_block_forward.6} parent=0 // pred_fallthru
    _
  // Predicated region
  $region10: #{basic_block_forward.6} parent=0 // pred_check
    _
  $region11: #{basic_block_forward.6} parent=0 // pred_check_branch
    %13 = sbr.rel (0) target = $region13
  $region12: #{basic_block_forward.6} parent=0 // pred_region
    _
  $region13: #{basic_block_forward.6} parent=0 // pred_fallthru
    _
  %v14 = vld [vmem:[%s0] sm:$0xff]
  %v15 = vld [vmem:[%s0 + $0x8] sm:$0xff]
  %v16 = vld [vmem:[%s0 + $0x10] sm:$0xff]
  %v17 = vld [vmem:[%s0 + $0x18] sm:$0xff]
  %v18 = vld [vmem:[%s0 + $0x20] sm:$0xff]
  %v19 = vld [vmem:[%s0 + $0x28] sm:$0xff]
  %v20 = vld [vmem:[%s0 + $0x30] sm:$0xff]
  %v21 = vld [vmem:[%s0 + $0x38] sm:$0xff]
  %v22 = vld [vmem:[%s0 + $0x40] sm:$0xff]
  %v23 = vld [vmem:[%s0 + $0x48] sm:$0xff]
  %v24 = vld [vmem:[%s0 + $0x50] sm:$0xff]
  %v25 = vld [vmem:[%s0 + $0x58] sm:$0xff]
  %v26 = vld [vmem:[%s0 + $0x60] sm:$0xff]
  %v27 = vld [vmem:[%s0 + $0x68] sm:$0xff]
  %v28 = vld [vmem:[%s0 + $0x70] sm:$0xff]
  %v29 = vld [vmem:[%s0 + $0x78] sm:$0xff]
  %v30 = vld [vmem:[%s1] sm:$0x1]
  %v32 = vlaneseq
  %v33 = vshrl.u32 %v32, 7
  %v34 = vsub.s32 0, %v33
  %v35 = vrot.slane %v30, %v34
  %v37 = vmul.f32 %v14, %v35
  %v38 = vmul.f32 %v15, %v35
  %v39 = vmul.f32 %v16, %v35
  %v40 = vmul.f32 %v17, %v35
  %v41 = vmul.f32 %v18, %v35
  %v42 = vmul.f32 %v19, %v35
  %v43 = vmul.f32 %v20, %v35
  %v44 = vmul.f32 %v21, %v35
  %v45 = vmul.f32 %v22, %v35
  %v46 = vmul.f32 %v23, %v35
  %v47 = vmul.f32 %v24, %v35
  %v48 = vmul.f32 %v25, %v35
  %v49 = vmul.f32 %v26, %v35
  %v50 = vmul.f32 %v27, %v35
  %v51 = vmul.f32 %v28, %v35
  %v52 = vmul.f32 %v29, %v35
  %v53 = vld [vmem:[%s2] sm:$0x1]
  %v55 = vlaneseq
  %v56 = vshrl.u32 %v55, 7
  %v57 = vsub.s32 0, %v56
  %v58 = vrot.slane %v53, %v57
  %v60 = vadd.f32 %v37, %v58
  %v61 = vadd.f32 %v38, %v58
  %v62 = vadd.f32 %v39, %v58
  %v63 = vadd.f32 %v40, %v58
  %v64 = vadd.f32 %v41, %v58
  %v65 = vadd.f32 %v42, %v58
  %v66 = vadd.f32 %v43, %v58
  %v67 = vadd.f32 %v44, %v58
  %v68 = vadd.f32 %v45, %v58
  %v69 = vadd.f32 %v46, %v58
  %v70 = vadd.f32 %v47, %v58
  %v71 = vadd.f32 %v48, %v58
  %v72 = vadd.f32 %v49, %v58
  %v73 = vadd.f32 %v50, %v58
  %v74 = vadd.f32 %v51, %v58
  %v75 = vadd.f32 %v52, %v58
  %v76 = vmax.f32 %v60, 0.0
  %v77 = vmax.f32 %v61, 0.0
  %v78 = vmax.f32 %v62, 0.0
  %v79 = vmax.f32 %v63, 0.0
  %v80 = vmax.f32 %v64, 0.0
  %v81 = vmax.f32 %v65, 0.0
  %v82 = vmax.f32 %v66, 0.0
  %v83 = vmax.f32 %v67, 0.0
  %v84 = vmax.f32 %v68, 0.0
  %v85 = vmax.f32 %v69, 0.0
  %v86 = vmax.f32 %v70, 0.0
  %v87 = vmax.f32 %v71, 0.0
  %v88 = vmax.f32 %v72, 0.0
  %v89 = vmax.f32 %v73, 0.0
  %v90 = vmax.f32 %v74, 0.0
  %v91 = vmax.f32 %v75, 0.0
  %v92 = vpack.c.bf16 %v77, %v76
  %v93 = vpack.c.bf16 %v79, %v78
  %v94 = vpack.c.bf16 %v81, %v80
  %v95 = vpack.c.bf16 %v83, %v82
  %v96 = vpack.c.bf16 %v85, %v84
  %v97 = vpack.c.bf16 %v87, %v86
  %v98 = vpack.c.bf16 %v89, %v88
  %v99 = vpack.c.bf16 %v91, %v90
  %v108 = vunpack.c.l.b16 %v92
  %v109 = vunpack.c.h.b16 %v92
  %v110 = vunpack.c.l.b16 %v93
  %v111 = vunpack.c.h.b16 %v93
  %v112 = vunpack.c.l.b16 %v94
  %v113 = vunpack.c.h.b16 %v94
  %v114 = vunpack.c.l.b16 %v95
  %v115 = vunpack.c.h.b16 %v95
  %v116 = vunpack.c.l.b16 %v96
  %v117 = vunpack.c.h.b16 %v96
  %v118 = vunpack.c.l.b16 %v97
  %v119 = vunpack.c.h.b16 %v97
  %v120 = vunpack.c.l.b16 %v98
  %v121 = vunpack.c.h.b16 %v98
  %v122 = vunpack.c.l.b16 %v99
  %v123 = vunpack.c.h.b16 %v99
  %v124 = vpack.c.b16 %v108, %v108
  %v125 = vpack.c.b16 %v109, %v109
  %v126 = vpack.c.b16 %v110, %v110
  %v127 = vpack.c.b16 %v111, %v111
  %v128 = vpack.c.b16 %v112, %v112
  %v129 = vpack.c.b16 %v113, %v113
  %v130 = vpack.c.b16 %v114, %v114
  %v131 = vpack.c.b16 %v115, %v115
  %v132 = vpack.c.b16 %v116, %v116
  %v133 = vpack.c.b16 %v117, %v117
  %v134 = vpack.c.b16 %v118, %v118
  %v135 = vpack.c.b16 %v119, %v119
  %v136 = vpack.c.b16 %v120, %v120
  %v137 = vpack.c.b16 %v121, %v121
  %v138 = vpack.c.b16 %v122, %v122
  %v139 = vpack.c.b16 %v123, %v123
  %156 = vst [vmem:[%s3] sm:$0xf] %v124
  %157 = vst [vmem:[%s3 + $0x4] sm:$0xf] %v125
  %158 = vst [vmem:[%s3 + $0x8] sm:$0xf] %v126
  %159 = vst [vmem:[%s3 + $0xc] sm:$0xf] %v127
  %160 = vst [vmem:[%s3 + $0x10] sm:$0xf] %v128
  %161 = vst [vmem:[%s3 + $0x14] sm:$0xf] %v129
  %162 = vst [vmem:[%s3 + $0x18] sm:$0xf] %v130
  %163 = vst [vmem:[%s3 + $0x1c] sm:$0xf] %v131
  %164 = vst [vmem:[%s3 + $0x20] sm:$0xf] %v132
  %165 = vst [vmem:[%s3 + $0x24] sm:$0xf] %v133
  %166 = vst [vmem:[%s3 + $0x28] sm:$0xf] %v134
  %167 = vst [vmem:[%s3 + $0x2c] sm:$0xf] %v135
  %168 = vst [vmem:[%s3 + $0x30] sm:$0xf] %v136
  %169 = vst [vmem:[%s3 + $0x34] sm:$0xf] %v137
  %170 = vst [vmem:[%s3 + $0x38] sm:$0xf] %v138
  %171 = vst [vmem:[%s3 + $0x3c] sm:$0xf] %v139
  // Predicated region
  $region14: #{basic_block_forward.6} parent=0 // pred_check
    _
  $region15: #{basic_block_forward.6} parent=0 // pred_check_branch
    %173 = sbr.rel (0) target = $region17
  $region16: #{basic_block_forward.6} parent=0 // pred_region
    _
  $region17: #{basic_block_forward.6} parent=0 // pred_fallthru
    _
  // Predicated region
  $region18: #{basic_block_forward.6} parent=0 // pred_check
    _
  $region19: #{basic_block_forward.6} parent=0 // pred_check_branch
    %175 = sbr.rel (0) target = $region21
  $region20: #{basic_block_forward.6} parent=0 // pred_region
    _
  $region21: #{basic_block_forward.6} parent=0 // pred_fallthru
    _

// kernel: basic_block_forward.5
$region0: #{basic_block_forward.5}
  #allocation0 [shape = 'u32[]', space=smem, size = 0x4, offset = 0x4, fixed_abs, tag = 'smem constant byte address 0x4 - core index']
  #allocation1 [shape = 'u32[144,128]{1,0:T(1,128)}', space=vmem, size = 0x12000, scoped, tag = 'internal scratch']
  #allocation2 [shape = 'f32[128,128]{1,0:T(8,128)}', space=vmem, size = 0x10000, scoped, tag = 'scratch operand']
  %s0 = inlined_call_operand.vmem [shape: bf16[128,1152], index: 0, kind: input, shape index: {}]
  %s1 = inlined_call_operand.vmem [shape: bf16[1152,128], index: 1, kind: input, shape index: {}]
  %s2 = inlined_call_operand.vmem [shape: f32[128,128], index: 2, kind: output, shape index: {0}]
  %s3 = inlined_call_operand.vmem [shape: f32[1,8,128], index: 3, kind: output, shape index: {1}]
  %4 = xla_tuple %s2, %s3
  %s5 = sld [smem:[#allocation0]]
  $region83: #{basic_block_forward.5} parent=0
    _
  %s7 = ssub.s32 1, %s5
  %s8 = scalar_select 0, %s7, %s5
  $region1: #{basic_block_forward.5} parent=0
    #allocation3 [shape = 'u8[196608]{0}', space=vmem, size = 0x30000, scoped, tag = 'input window, operand 0']
    loop: start=0, step=1, limit=5
    $region2: #{basic_block_forward.5} parent=1 // loop_pre_header
      _
    $region3: #{basic_block_forward.5} parent=1 // loop_header
      %s10 = sphi 0, %s14
      %p11 = scmp.ge.s32.totalorder %s10, 5
      %s17 = sphi 0, %s36
      %s18 = sphi 0, %s32
      %s19 = sphi 0, %s28
      %s20 = sphi 0, %s17
      %s21 = sphi 0, %s18
      %s22 = sphi 0, %s19
      %s23 = sphi 0, %s20
      %s24 = sphi 0, %s21
      %s25 = sphi 0, %s22
      %s41 = sphi 0, %s43
      %s44 = sphi 0, %s41
      %s45 = sphi 0, %s44
      %s61 = sphi 0, %s45
      %s69 = sphi 0, %s71
      %s72 = sphi 0, %s69
      %s73 = sphi 0, %s72
      %s89 = sphi 0, %s73
      %s97 = sphi 0, %s99
      %s100 = sphi 0, %s97
      %s101 = sphi 0, %s100
      %s117 = sphi 0, %s101
      %s125 = sphi 0, %s127
      %s128 = sphi 0, %s125
      %s129 = sphi 0, %s128
      %s145 = sphi 0, %s129
    $region4: #{basic_block_forward.5} parent=1 // loop_header_branch
      %13 = sbr.rel (%p11) target = $region8
    $region5: #{basic_block_forward.5} parent=1 // loop_body
      %s15 = ssub.s32 %s10, 1
      %s16 = ssub.s32 %s10, 2
      %s26 = sadd.s32 1, %s19
      %p27 = scmp.ge.s32.totalorder %s26, 3
      %s28 = scalar_select %p27, 0, %s26
      %s29 = sadd.s32 1, %s18
      %s30 = scalar_select %p27, %s29, %s18
      %p31 = scmp.ge.s32.totalorder %s30, 1
      %s32 = scalar_select %p31, 0, %s30
      %s33 = sadd.s32 1, %s17
      %s34 = scalar_select %p31, %s33, %s17
      %p35 = scmp.ge.s32.totalorder %s34, 1
      %s36 = scalar_select %p35, 0, %s34
      %s37 = ssub.s32 %s17, %s36
      %s38 = ssub.s32 %s19, %s28
      %s39 = sor.u32 %s37, %s38
      %p40 = scmp.eq.s32.totalorder %s39, 0
      %s42 = sadd.s32 %s41, 1
      %s43 = scalar_select %p40, %s41, %s42
      %p46 = pneg %p40
      %p47 = scmp.eq.s32.totalorder %s10, 2
      %p48 = por %p46, %p47
      %p49 = scmp.ne.s32.totalorder %s41, %s44
      %p50 = scmp.eq.s32.totalorder %s10, 0
      %p51 = por %p49, %p50
      %p52 = scmp.ne.s32.totalorder %s41, %s44
      %p53 = scmp.eq.s32.totalorder %s15, 2
      %p54 = por %p52, %p53
      %p55 = scmp.ne.s32.totalorder %s44, %s45
      %p56 = scmp.eq.s32.totalorder %s15, 0
      %p57 = por %p55, %p56
      %p58 = scmp.ne.s32.totalorder %s44, %s45
      %p59 = scmp.eq.s32.totalorder %s16, 2
      %p60 = por %p58, %p59
      %p62 = scmp.ne.s32.totalorder %s45, %s61
      %p63 = scmp.eq.s32.totalorder %s16, 0
      %p64 = por %p62, %p63
      %s65 = ssub.s32 %s19, %s28
      %s66 = ssub.s32 %s18, %s32
      %s67 = sor.u32 %s65, %s66
      %p68 = scmp.eq.s32.totalorder %s67, 0
      %s70 = sadd.s32 %s69, 1
      %s71 = scalar_select %p68, %s69, %s70
      %p74 = pneg %p68
      %p75 = scmp.eq.s32.totalorder %s10, 2
      %p76 = por %p74, %p75
      %p77 = scmp.ne.s32.totalorder %s69, %s72
      %p78 = scmp.eq.s32.totalorder %s10, 0
      %p79 = por %p77, %p78
      %p80 = scmp.ne.s32.totalorder %s69, %s72
      %p81 = scmp.eq.s32.totalorder %s15, 2
      %p82 = por %p80, %p81
      %p83 = scmp.ne.s32.totalorder %s72, %s73
      %p84 = scmp.eq.s32.totalorder %s15, 0
      %p85 = por %p83, %p84
      %p86 = scmp.ne.s32.totalorder %s72, %s73
      %p87 = scmp.eq.s32.totalorder %s16, 2
      %p88 = por %p86, %p87
      %p90 = scmp.ne.s32.totalorder %s73, %s89
      %p91 = scmp.eq.s32.totalorder %s16, 0
      %p92 = por %p90, %p91
      %s93 = ssub.s32 %s17, %s36
      %s94 = ssub.s32 %s18, %s32
      %s95 = sor.u32 %s93, %s94
      %p96 = scmp.eq.s32.totalorder %s95, 0
      %s98 = sadd.s32 %s97, 1
      %s99 = scalar_select %p96, %s97, %s98
      %p102 = pneg %p96
      %p103 = scmp.eq.s32.totalorder %s10, 2
      %p104 = por %p102, %p103
      %p105 = scmp.ne.s32.totalorder %s97, %s100
      %p106 = scmp.eq.s32.totalorder %s10, 0
      %p107 = por %p105, %p106
      %p108 = scmp.ne.s32.totalorder %s97, %s100
      %p109 = scmp.eq.s32.totalorder %s15, 2
      %p110 = por %p108, %p109
      %p111 = scmp.ne.s32.totalorder %s100, %s101
      %p112 = scmp.eq.s32.totalorder %s15, 0
      %p113 = por %p111, %p112
      %p114 = scmp.ne.s32.totalorder %s100, %s101
      %p115 = scmp.eq.s32.totalorder %s16, 2
      %p116 = por %p114, %p115
      %p118 = scmp.ne.s32.totalorder %s101, %s117
      %p119 = scmp.eq.s32.totalorder %s16, 0
      %p120 = por %p118, %p119
      %s121 = ssub.s32 %s17, %s36
      %s122 = ssub.s32 %s18, %s32
      %s123 = sor.u32 %s121, %s122
      %p124 = scmp.eq.s32.totalorder %s123, 0
      %s126 = sadd.s32 %s125, 1
      %s127 = scalar_select %p124, %s125, %s126
      %p130 = pneg %p124
      %p131 = scmp.eq.s32.totalorder %s10, 2
      %p132 = por %p130, %p131
      %p133 = scmp.ne.s32.totalorder %s125, %s128
      %p134 = scmp.eq.s32.totalorder %s10, 0
      %p135 = por %p133, %p134
      %p136 = scmp.ne.s32.totalorder %s125, %s128
      %p137 = scmp.eq.s32.totalorder %s15, 2
      %p138 = por %p136, %p137
      %p139 = scmp.ne.s32.totalorder %s128, %s129
      %p140 = scmp.eq.s32.totalorder %s15, 0
      %p141 = por %p139, %p140
      %p142 = scmp.ne.s32.totalorder %s128, %s129
      %p143 = scmp.eq.s32.totalorder %s16, 2
      %p144 = por %p142, %p143
      %p146 = scmp.ne.s32.totalorder %s129, %s145
      %p147 = scmp.eq.s32.totalorder %s16, 0
      %p148 = por %p146, %p147
      %p149 = scmp.le.s32.totalorder 1, %s10
      %p150 = scmp.lt.s32.totalorder %s10, 4
      %p151 = pnand %p149, %p150
      %p152 = pneg %p151
      // Predicated region
      $region9: #{basic_block_forward.5} parent=5 // pred_check
        _
      $region10: #{basic_block_forward.5} parent=5 // pred_check_branch
        %154 = sbr.rel (%p151) target = $region12
      $region11: #{basic_block_forward.5} parent=5 // pred_region
        %s155 = ssub.s32 %s10, 1
      $region12: #{basic_block_forward.5} parent=5 // pred_fallthru
        _
      %p156 = scmp.lt.s32.totalorder %s10, 3
      // Predicated region
      $region13: #{basic_block_forward.5} parent=5 // pred_check
        %p157 = pneg %p156
      $region14: #{basic_block_forward.5} parent=5 // pred_check_branch
        %159 = sbr.rel (%p157) target = $region16
      $region15: #{basic_block_forward.5} parent=5 // pred_region
        // Predicated region
        $region17: #{basic_block_forward.5} parent=15 // pred_check
          %p160 = pneg %p51
        $region18: #{basic_block_forward.5} parent=15 // pred_check_branch
          %162 = sbr.rel (%p160) target = $region20
        $region19: #{basic_block_forward.5} parent=15 // pred_region
          %s163 = sand.u32 %s41, 1
          %s164 = sand.u32 %s41, 1
          %s165 = smul.addr %s164, 192
          %s166 = scalar_lea.vmem [#allocation3], %s165
          %s167 = smul.u32 16, %s17
          %s168 = smul.u32 3, %s19
          %s169 = smul.addr %s167, 9
          %s170 = sadd.s32 %s168, %s169
          %s171 = smul.addr %s170, 4
          %s172 = scalar_lea.vmem %s0, %s171
          // Predicated region
          $region21: #{basic_block_forward.5} parent=19 // pred_check
            _
          $region22: #{basic_block_forward.5} parent=19 // pred_check_branch
            %174 = sbr.rel (0) target = $region24
          $region23: #{basic_block_forward.5} parent=19 // pred_region
            // Predicated region
            $region25: #{basic_block_forward.5} parent=23 // pred_check
              _
            $region26: #{basic_block_forward.5} parent=23 // pred_check_branch
              %176 = sbr.rel (0) target = $region28
            $region27: #{basic_block_forward.5} parent=23 // pred_region
              %s177 = scalar_lea.vmem %s172, 8
              %s178 = scalar_lea.vmem %s166, 8 [#allocation3]
              loop: start=0, step=1, limit=1
              $region29: #{basic_block_forward.5} parent=27 // loop_pre_header
                _
              $region30: #{basic_block_forward.5} parent=27 // loop_header
                %s180 = sphi 0, %s184
                %p181 = scmp.ge.s32.totalorder %s180, 1
                %s185 = sphi %s172, %s172
                %s186 = sphi %s166, %s166
              $region31: #{basic_block_forward.5} parent=27 // loop_header_branch
                %183 = sbr.rel (%p181) target = $region35
              $region32: #{basic_block_forward.5} parent=27 // loop_body
                %v187 = vld [vmem:[%s185] sm:$0xff]
                %188 = vst [vmem:[%s186] sm:$0xff] %v187
                %v189 = vld [vmem:[%s185 + $0x24] sm:$0xff]
                %190 = vst [vmem:[%s186 + $0xc] sm:$0xff] %v189
                %v191 = vld [vmem:[%s185 + $0x48] sm:$0xff]
                %192 = vst [vmem:[%s186 + $0x18] sm:$0xff] %v191
                %v193 = vld [vmem:[%s185 + $0x6c] sm:$0xff]
                %194 = vst [vmem:[%s186 + $0x24] sm:$0xff] %v193
                %v195 = vld [vmem:[%s185 + $0x90] sm:$0xff]
                %196 = vst [vmem:[%s186 + $0x30] sm:$0xff] %v195
                %v197 = vld [vmem:[%s185 + $0xb4] sm:$0xff]
                %198 = vst [vmem:[%s186 + $0x3c] sm:$0xff] %v197
                %v199 = vld [vmem:[%s185 + $0xd8] sm:$0xff]
                %200 = vst [vmem:[%s186 + $0x48] sm:$0xff] %v199
                %v201 = vld [vmem:[%s185 + $0xfc] sm:$0xff]
                %202 = vst [vmem:[%s186 + $0x54] sm:$0xff] %v201
                %v203 = vld [vmem:[%s185 + $0x120] sm:$0xff]
                %204 = vst [vmem:[%s186 + $0x60] sm:$0xff] %v203
                %v205 = vld [vmem:[%s185 + $0x144] sm:$0xff]
                %206 = vst [vmem:[%s186 + $0x6c] sm:$0xff] %v205
                %v207 = vld [vmem:[%s185 + $0x168] sm:$0xff]
                %208 = vst [vmem:[%s186 + $0x78] sm:$0xff] %v207
                %v209 = vld [vmem:[%s185 + $0x18c] sm:$0xff]
                %210 = vst [vmem:[%s186 + $0x84] sm:$0xff] %v209
                %v211 = vld [vmem:[%s185 + $0x1b0] sm:$0xff]
                %212 = vst [vmem:[%s186 + $0x90] sm:$0xff] %v211
                %v213 = vld [vmem:[%s185 + $0x1d4] sm:$0xff]
                %214 = vst [vmem:[%s186 + $0x9c] sm:$0xff] %v213
                %v215 = vld [vmem:[%s185 + $0x1f8] sm:$0xff]
                %216 = vst [vmem:[%s186 + $0xa8] sm:$0xff] %v215
                %v217 = vld [vmem:[%s185 + $0x21c] sm:$0xff]
                %218 = vst [vmem:[%s186 + $0xb4] sm:$0xff] %v217
              $region33: #{basic_block_forward.5} parent=27 // loop_footer
                %s184 = sadd.s32 1, %s180
              $region34: #{basic_block_forward.5} parent=27 // loop_footer_branch
                %179 = sbr.rel target = $region30
              $region35: #{basic_block_forward.5} parent=27 // loop_exit
                _
              loop: start=0, step=1, limit=1
              $region36: #{basic_block_forward.5} parent=27 // loop_pre_header
                _
              $region37: #{basic_block_forward.5} parent=27 // loop_header
                %s221 = sphi 0, %s225
                %p222 = scmp.ge.s32.totalorder %s221, 1
                %s226 = sphi %s177, %s177
                %s227 = sphi %s178, %s178
              $region38: #{basic_block_forward.5} parent=27 // loop_header_branch
                %224 = sbr.rel (%p222) target = $region42
              $region39: #{basic_block_forward.5} parent=27 // loop_body
                %v228 = vld [vmem:[%s226] sm:$0xf]
                %229 = vst [vmem:[%s227] sm:$0xf] %v228
                %v230 = vld [vmem:[%s226 + $0x24] sm:$0xf]
                %231 = vst [vmem:[%s227 + $0xc] sm:$0xf] %v230
                %v232 = vld [vmem:[%s226 + $0x48] sm:$0xf]
                %233 = vst [vmem:[%s227 + $0x18] sm:$0xf] %v232
                %v234 = vld [vmem:[%s226 + $0x6c] sm:$0xf]
                %235 = vst [vmem:[%s227 + $0x24] sm:$0xf] %v234
                %v236 = vld [vmem:[%s226 + $0x90] sm:$0xf]
                %237 = vst [vmem:[%s227 + $0x30] sm:$0xf] %v236
                %v238 = vld [vmem:[%s226 + $0xb4] sm:$0xf]
                %239 = vst [vmem:[%s227 + $0x3c] sm:$0xf] %v238
                %v240 = vld [vmem:[%s226 + $0xd8] sm:$0xf]
                %241 = vst [vmem:[%s227 + $0x48] sm:$0xf] %v240
                %v242 = vld [vmem:[%s226 + $0xfc] sm:$0xf]
                %243 = vst [vmem:[%s227 + $0x54] sm:$0xf] %v242
                %v244 = vld [vmem:[%s226 + $0x120] sm:$0xf]
                %245 = vst [vmem:[%s227 + $0x60] sm:$0xf] %v244
                %v246 = vld [vmem:[%s226 + $0x144] sm:$0xf]
                %247 = vst [vmem:[%s227 + $0x6c] sm:$0xf] %v246
                %v248 = vld [vmem:[%s226 + $0x168] sm:$0xf]
                %249 = vst [vmem:[%s227 + $0x78] sm:$0xf] %v248
                %v250 = vld [vmem:[%s226 + $0x18c] sm:$0xf]
                %251 = vst [vmem:[%s227 + $0x84] sm:$0xf] %v250
                %v252 = vld [vmem:[%s226 + $0x1b0] sm:$0xf]
                %253 = vst [vmem:[%s227 + $0x90] sm:$0xf] %v252
                %v254 = vld [vmem:[%s226 + $0x1d4] sm:$0xf]
                %255 = vst [vmem:[%s227 + $0x9c] sm:$0xf] %v254
                %v256 = vld [vmem:[%s226 + $0x1f8] sm:$0xf]
                %257 = vst [vmem:[%s227 + $0xa8] sm:$0xf] %v256
                %v258 = vld [vmem:[%s226 + $0x21c] sm:$0xf]
                %259 = vst [vmem:[%s227 + $0xb4] sm:$0xf] %v258
              $region40: #{basic_block_forward.5} parent=27 // loop_footer
                %s225 = sadd.s32 1, %s221
              $region41: #{basic_block_forward.5} parent=27 // loop_footer_branch
                %220 = sbr.rel target = $region37
              $region42: #{basic_block_forward.5} parent=27 // loop_exit
                _
            $region28: #{basic_block_forward.5} parent=23 // pred_fallthru
              _
          $region24: #{basic_block_forward.5} parent=19 // pred_fallthru
            _
          %260 = vnop
        $region20: #{basic_block_forward.5} parent=15 // pred_fallthru
          _
        // Predicated region
        $region43: #{basic_block_forward.5} parent=15 // pred_check
          %p261 = pneg %p79
        $region44: #{basic_block_forward.5} parent=15 // pred_check_branch
          %263 = sbr.rel (%p261) target = $region46
        $region45: #{basic_block_forward.5} parent=15 // pred_region
          %s264 = smul.u32 48, %s19
          %p265 = scmp.lt.s32.totalorder %s264, 143
          %s266 = scalar_select %p265, %s264, 143
          %p267 = scmp.lt.s32.totalorder %s18, 0
          %s268 = scalar_select %p267, %s18, 0
          %s269 = sadd.s32 %s268, %s266
          %s270 = smul.addr %s269, 4
          %s271 = scalar_lea.vmem %s1, %s270
          %s272 = smul.u32 48, %s19
        $region46: #{basic_block_forward.5} parent=15 // pred_fallthru
          _
      $region16: #{basic_block_forward.5} parent=5 // pred_fallthru
        _
      %p273 = scmp.le.s32.totalorder 1, %s10
      %p274 = scmp.lt.s32.totalorder %s10, 4
      %p275 = pnand %p273, %p274
      %p276 = pneg %p275
      // Predicated region
      $region47: #{basic_block_forward.5} parent=5 // pred_check
        _
      $region48: #{basic_block_forward.5} parent=5 // pred_check_branch
        %278 = sbr.rel (%p275) target = $region50
      $region49: #{basic_block_forward.5} parent=5 // pred_region
        %s279 = ssub.s32 %s10, 1
        %s280 = sand.u32 %s44, 1
        %s281 = sand.u32 %s44, 1
        %s282 = smul.addr %s281, 192
        %s283 = scalar_lea.vmem [#allocation3], %s282
        // Predicated region
        $region51: #{basic_block_forward.5} parent=49 // pred_check
          %p284 = pneg %p57
        $region52: #{basic_block_forward.5} parent=49 // pred_check_branch
          %286 = sbr.rel (%p284) target = $region54
        $region53: #{basic_block_forward.5} parent=49 // pred_region
          _
        $region54: #{basic_block_forward.5} parent=49 // pred_fallthru
          _
        %s287 = sand.u32 %s44, 1
        %s288 = sand.u32 %s44, 1
        %s289 = smul.addr %s288, 192
        %s290 = scalar_lea.vmem [#allocation3], %s289
        %p291 = pneg %p57
        %p292 = pneg %p54
        %s293 = smul.u32 48, %s22
        %p294 = scmp.lt.s32.totalorder %s293, 143
        %s295 = scalar_select %p294, %s293, 143
        %p296 = scmp.lt.s32.totalorder %s21, 0
        %s297 = scalar_select %p296, %s21, 0
        %s298 = sadd.s32 %s297, %s295
        %s299 = smul.addr %s298, 4
        %s300 = scalar_lea.vmem %s1, %s299
        %p301 = pneg %p85
        %p302 = pneg %p82
        %p303 = pneg %p113
        %p304 = pneg %p110
        %s305 = smul.u32 16, %s20
        %p306 = scmp.lt.s32.totalorder %s305, 15
        %s307 = scalar_select %p306, %s305, 15
        %p308 = scmp.lt.s32.totalorder %s21, 0
        %s309 = scalar_select %p308, %s21, 0
        %s310 = sadd.s32 %s309, %s307
        %s311 = smul.addr %s310, 8
        %s312 = scalar_lea.vmem %s2, %s311
        %p313 = pneg %p141
        %p314 = pneg %p138
        %p315 = scmp.lt.s32.totalorder %s20, 0
        %s316 = scalar_select %p315, %s20, 0
        %p317 = scmp.lt.s32.totalorder %s21, 0
        %s318 = scalar_select %p317, %s21, 0
        %s319 = sadd.s32 %s318, %s316
        %s320 = smul.addr %s319, 8
        %s321 = scalar_lea.vmem %s3, %s320
        %s322 = smul.u32 16, %s20
        %s323 = smul.u32 3, %s22
        %s324 = smul.u32 48, %s22
        %p325 = scmp.lt.s32.totalorder %s324, 143
        %s326 = scalar_select %p325, %s324, 143
        %p327 = scmp.lt.s32.totalorder %s21, 0
        %s328 = scalar_select %p327, %s21, 0
        %s329 = sadd.s32 %s328, %s326
        %s330 = smul.addr %s329, 4
        %s331 = scalar_lea.vmem %s1, %s330
        %s332 = smul.u32 48, %s22
        %s333 = smul.u32 16, %s20
        %p334 = scmp.lt.s32.totalorder %s333, 15
        %s335 = scalar_select %p334, %s333, 15
        %p336 = scmp.lt.s32.totalorder %s21, 0
        %s337 = scalar_select %p336, %s21, 0
        %s338 = sadd.s32 %s337, %s335
        %s339 = smul.addr %s338, 8
        %s340 = scalar_lea.vmem %s2, %s339
        %s341 = smul.u32 16, %s20
        %p342 = scmp.lt.s32.totalorder %s20, 0
        %s343 = scalar_select %p342, %s20, 0
        %p344 = scmp.lt.s32.totalorder %s21, 0
        %s345 = scalar_select %p344, %s21, 0
        %s346 = sadd.s32 %s345, %s343
        %s347 = smul.addr %s346, 8
        %s348 = scalar_lea.vmem %s3, %s347
        %p350 = scmp.eq.s32.totalorder %s22, 0
        // Predicated region
        $region55: #{basic_block_forward.5} parent=49 // pred_check
          %p351 = pneg %p350
        $region56: #{basic_block_forward.5} parent=49 // pred_check_branch
          %353 = sbr.rel (%p351) target = $region58
        $region57: #{basic_block_forward.5} parent=49 // pred_region
          %354 = vst [vmem:[#allocation2] sm:$0xff] 0.0
          %355 = vst [vmem:[#allocation2 + $0x8] sm:$0xff] 0.0
          %356 = vst [vmem:[#allocation2 + $0x10] sm:$0xff] 0.0
          %357 = vst [vmem:[#allocation2 + $0x18] sm:$0xff] 0.0
          %358 = vst [vmem:[#allocation2 + $0x20] sm:$0xff] 0.0
          %359 = vst [vmem:[#allocation2 + $0x28] sm:$0xff] 0.0
          %360 = vst [vmem:[#allocation2 + $0x30] sm:$0xff] 0.0
          %361 = vst [vmem:[#allocation2 + $0x38] sm:$0xff] 0.0
          %362 = vst [vmem:[#allocation2 + $0x40] sm:$0xff] 0.0
          %363 = vst [vmem:[#allocation2 + $0x48] sm:$0xff] 0.0
          %364 = vst [vmem:[#allocation2 + $0x50] sm:$0xff] 0.0
          %365 = vst [vmem:[#allocation2 + $0x58] sm:$0xff] 0.0
          %366 = vst [vmem:[#allocation2 + $0x60] sm:$0xff] 0.0
          %367 = vst [vmem:[#allocation2 + $0x68] sm:$0xff] 0.0
          %368 = vst [vmem:[#allocation2 + $0x70] sm:$0xff] 0.0
          %369 = vst [vmem:[#allocation2 + $0x78] sm:$0xff] 0.0
        $region58: #{basic_block_forward.5} parent=49 // pred_fallthru
          _
        %v370 = vld [vmem:[#allocation2] sm:$0xff]
        %v371 = vld [vmem:[#allocation2 + $0x8] sm:$0xff]
        %v372 = vld [vmem:[#allocation2 + $0x10] sm:$0xff]
        %v373 = vld [vmem:[#allocation2 + $0x18] sm:$0xff]
        %v374 = vld [vmem:[#allocation2 + $0x20] sm:$0xff]
        %v375 = vld [vmem:[#allocation2 + $0x28] sm:$0xff]
        %v376 = vld [vmem:[#allocation2 + $0x30] sm:$0xff]
        %v377 = vld [vmem:[#allocation2 + $0x38] sm:$0xff]
        %v378 = vld [vmem:[#allocation2 + $0x40] sm:$0xff]
        %v379 = vld [vmem:[#allocation2 + $0x48] sm:$0xff]
        %v380 = vld [vmem:[#allocation2 + $0x50] sm:$0xff]
        %v381 = vld [vmem:[#allocation2 + $0x58] sm:$0xff]
        %v382 = vld [vmem:[#allocation2 + $0x60] sm:$0xff]
        %v383 = vld [vmem:[#allocation2 + $0x68] sm:$0xff]
        %v384 = vld [vmem:[#allocation2 + $0x70] sm:$0xff]
        %v385 = vld [vmem:[#allocation2 + $0x78] sm:$0xff]
        %v386 = vld [vmem:[%s283] sm:$0xff]
        %v387 = vld [vmem:[%s283 + $0x8] sm:$0xf]
        %v388 = vld [vmem:[%s283 + $0xc] sm:$0xff]
        %v389 = vld [vmem:[%s283 + $0x14] sm:$0xf]
        %v390 = vld [vmem:[%s283 + $0x18] sm:$0xff]
        %v391 = vld [vmem:[%s283 + $0x20] sm:$0xf]
        %v392 = vld [vmem:[%s283 + $0x24] sm:$0xff]
        %v393 = vld [vmem:[%s283 + $0x2c] sm:$0xf]
        %v394 = vld [vmem:[%s283 + $0x30] sm:$0xff]
        %v395 = vld [vmem:[%s283 + $0x38] sm:$0xf]
        %v396 = vld [vmem:[%s283 + $0x3c] sm:$0xff]
        %v397 = vld [vmem:[%s283 + $0x44] sm:$0xf]
        %v398 = vld [vmem:[%s283 + $0x48] sm:$0xff]
        %v399 = vld [vmem:[%s283 + $0x50] sm:$0xf]
        %v400 = vld [vmem:[%s283 + $0x54] sm:$0xff]
        %v401 = vld [vmem:[%s283 + $0x5c] sm:$0xf]
        %v402 = vld [vmem:[%s283 + $0x60] sm:$0xff]
        %v403 = vld [vmem:[%s283 + $0x68] sm:$0xf]
        %v404 = vld [vmem:[%s283 + $0x6c] sm:$0xff]
        %v405 = vld [vmem:[%s283 + $0x74] sm:$0xf]
        %v406 = vld [vmem:[%s283 + $0x78] sm:$0xff]
        %v407 = vld [vmem:[%s283 + $0x80] sm:$0xf]
        %v408 = vld [vmem:[%s283 + $0x84] sm:$0xff]
        %v409 = vld [vmem:[%s283 + $0x8c] sm:$0xf]
        %v410 = vld [vmem:[%s283 + $0x90] sm:$0xff]
        %v411 = vld [vmem:[%s283 + $0x98] sm:$0xf]
        %v412 = vld [vmem:[%s283 + $0x9c] sm:$0xff]
        %v413 = vld [vmem:[%s283 + $0xa4] sm:$0xf]
        %v414 = vld [vmem:[%s283 + $0xa8] sm:$0xff]
        %v415 = vld [vmem:[%s283 + $0xb0] sm:$0xf]
        %v416 = vld [vmem:[%s283 + $0xb4] sm:$0xff]
        %v417 = vld [vmem:[%s283 + $0xbc] sm:$0xf]
        %v418 = vld [vmem:[%s331] sm:$0xf]
        %v419 = vld [vmem:[%s331 + $0x4] sm:$0xf]
        %v420 = vld [vmem:[%s331 + $0x8] sm:$0xf]
        %v421 = vld [vmem:[%s331 + $0xc] sm:$0xf]
        %v422 = vld [vmem:[%s331 + $0x10] sm:$0xf]
        %v423 = vld [vmem:[%s331 + $0x14] sm:$0xf]
        %v424 = vld [vmem:[%s331 + $0x18] sm:$0xf]
        %v425 = vld [vmem:[%s331 + $0x1c] sm:$0xf]
        %v426 = vld [vmem:[%s331 + $0x20] sm:$0xf]
        %v427 = vld [vmem:[%s331 + $0x24] sm:$0xf]
        %v428 = vld [vmem:[%s331 + $0x28] sm:$0xf]
        %v429 = vld [vmem:[%s331 + $0x2c] sm:$0xf]
        %v430 = vld [vmem:[%s331 + $0x30] sm:$0xf]
        %v431 = vld [vmem:[%s331 + $0x34] sm:$0xf]
        %v432 = vld [vmem:[%s331 + $0x38] sm:$0xf]
        %v433 = vld [vmem:[%s331 + $0x3c] sm:$0xf]
        %v434 = vld [vmem:[%s331 + $0x40] sm:$0xf]
        %v435 = vld [vmem:[%s331 + $0x44] sm:$0xf]
        %v436 = vld [vmem:[%s331 + $0x48] sm:$0xf]
        %v437 = vld [vmem:[%s331 + $0x4c] sm:$0xf]
        %v438 = vld [vmem:[%s331 + $0x50] sm:$0xf]
        %v439 = vld [vmem:[%s331 + $0x54] sm:$0xf]
        %v440 = vld [vmem:[%s331 + $0x58] sm:$0xf]
        %v441 = vld [vmem:[%s331 + $0x5c] sm:$0xf]
        %v442 = vld [vmem:[%s331 + $0x60] sm:$0xf]
        %v443 = vld [vmem:[%s331 + $0x64] sm:$0xf]
        %v444 = vld [vmem:[%s331 + $0x68] sm:$0xf]
        %v445 = vld [vmem:[%s331 + $0x6c] sm:$0xf]
        %v446 = vld [vmem:[%s331 + $0x70] sm:$0xf]
        %v447 = vld [vmem:[%s331 + $0x74] sm:$0xf]
        %v448 = vld [vmem:[%s331 + $0x78] sm:$0xf]
        %v449 = vld [vmem:[%s331 + $0x7c] sm:$0xf]
        %v450 = vld [vmem:[%s331 + $0x80] sm:$0xf]
        %v451 = vld [vmem:[%s331 + $0x84] sm:$0xf]
        %v452 = vld [vmem:[%s331 + $0x88] sm:$0xf]
        %v453 = vld [vmem:[%s331 + $0x8c] sm:$0xf]
        %v454 = vld [vmem:[%s331 + $0x90] sm:$0xf]
        %v455 = vld [vmem:[%s331 + $0x94] sm:$0xf]
        %v456 = vld [vmem:[%s331 + $0x98] sm:$0xf]
        %v457 = vld [vmem:[%s331 + $0x9c] sm:$0xf]
        %v458 = vld [vmem:[%s331 + $0xa0] sm:$0xf]
        %v459 = vld [vmem:[%s331 + $0xa4] sm:$0xf]
        %v460 = vld [vmem:[%s331 + $0xa8] sm:$0xf]
        %v461 = vld [vmem:[%s331 + $0xac] sm:$0xf]
        %v462 = vld [vmem:[%s331 + $0xb0] sm:$0xf]
        %v463 = vld [vmem:[%s331 + $0xb4] sm:$0xf]
        %v464 = vld [vmem:[%s331 + $0xb8] sm:$0xf]
        %v465 = vld [vmem:[%s331 + $0xbc] sm:$0xf]
        %v498 = vunpack.c.l.b16 %v386
        %v499 = vunpack.c.h.b16 %v386
        %v500 = vunpack.c.l.b16 %v387
        %v501 = vunpack.c.l.b16 %v388
        %v502 = vunpack.c.h.b16 %v388
        %v503 = vunpack.c.l.b16 %v389
        %v504 = vunpack.c.l.b16 %v390
        %v505 = vunpack.c.h.b16 %v390
        %v506 = vunpack.c.l.b16 %v391
        %v507 = vunpack.c.l.b16 %v392
        %v508 = vunpack.c.h.b16 %v392
        %v509 = vunpack.c.l.b16 %v393
        %v510 = vunpack.c.l.b16 %v394
        %v511 = vunpack.c.h.b16 %v394
        %v512 = vunpack.c.l.b16 %v395
        %v513 = vunpack.c.l.b16 %v396
        %v514 = vunpack.c.h.b16 %v396
        %v515 = vunpack.c.l.b16 %v397
        %v516 = vunpack.c.l.b16 %v398
        %v517 = vunpack.c.h.b16 %v398
        %v518 = vunpack.c.l.b16 %v399
        %v519 = vunpack.c.l.b16 %v400
        %v520 = vunpack.c.h.b16 %v400
        %v521 = vunpack.c.l.b16 %v401
        %v522 = vunpack.c.l.b16 %v402
        %v523 = vunpack.c.h.b16 %v402
        %v524 = vunpack.c.l.b16 %v403
        %v525 = vunpack.c.l.b16 %v404
        %v526 = vunpack.c.h.b16 %v404
        %v527 = vunpack.c.l.b16 %v405
        %v528 = vunpack.c.l.b16 %v406
        %v529 = vunpack.c.h.b16 %v406
        %v530 = vunpack.c.l.b16 %v407
        %v531 = vunpack.c.l.b16 %v408
        %v532 = vunpack.c.h.b16 %v408
        %v533 = vunpack.c.l.b16 %v409
        %v534 = vunpack.c.l.b16 %v410
        %v535 = vunpack.c.h.b16 %v410
        %v536 = vunpack.c.l.b16 %v411
        %v537 = vunpack.c.l.b16 %v412
        %v538 = vunpack.c.h.b16 %v412
        %v539 = vunpack.c.l.b16 %v413
        %v540 = vunpack.c.l.b16 %v414
        %v541 = vunpack.c.h.b16 %v414
        %v542 = vunpack.c.l.b16 %v415
        %v543 = vunpack.c.l.b16 %v416
        %v544 = vunpack.c.h.b16 %v416
        %v545 = vunpack.c.l.b16 %v417
        %v546 = vpack.c.b16 %v501, %v498
        %v547 = vpack.c.b16 %v502, %v499
        %v548 = vpack.c.b16 %v503, %v500
        %v549 = vpack.c.b16 %v507, %v504
        %v550 = vpack.c.b16 %v508, %v505
        %v551 = vpack.c.b16 %v509, %v506
        %v552 = vpack.c.b16 %v513, %v510
        %v553 = vpack.c.b16 %v514, %v511
        %v554 = vpack.c.b16 %v515, %v512
        %v555 = vpack.c.b16 %v519, %v516
        %v556 = vpack.c.b16 %v520, %v517
        %v557 = vpack.c.b16 %v521, %v518
        %v558 = vpack.c.b16 %v525, %v522
        %v559 = vpack.c.b16 %v526, %v523
        %v560 = vpack.c.b16 %v527, %v524
        %v561 = vpack.c.b16 %v531, %v528
        %v562 = vpack.c.b16 %v532, %v529
        %v563 = vpack.c.b16 %v533, %v530
        %v564 = vpack.c.b16 %v537, %v534
        %v565 = vpack.c.b16 %v538, %v535
        %v566 = vpack.c.b16 %v539, %v536
        %v567 = vpack.c.b16 %v543, %v540
        %v568 = vpack.c.b16 %v544, %v541
        %v569 = vpack.c.b16 %v545, %v542
        %v642 = vunpack.c.l.b16 %v418
        %v643 = vunpack.c.l.b16 %v419
        %v644 = vunpack.c.l.b16 %v420
        %v645 = vunpack.c.l.b16 %v421
        %v646 = vunpack.c.l.b16 %v422
        %v647 = vunpack.c.l.b16 %v423
        %v648 = vunpack.c.l.b16 %v424
        %v649 = vunpack.c.l.b16 %v425
        %v650 = vunpack.c.l.b16 %v426
        %v651 = vunpack.c.l.b16 %v427
        %v652 = vunpack.c.l.b16 %v428
        %v653 = vunpack.c.l.b16 %v429
        %v654 = vunpack.c.l.b16 %v430
        %v655 = vunpack.c.l.b16 %v431
        %v656 = vunpack.c.l.b16 %v432
        %v657 = vunpack.c.l.b16 %v433
        %v658 = vunpack.c.l.b16 %v434
        %v659 = vunpack.c.l.b16 %v435
        %v660 = vunpack.c.l.b16 %v436
        %v661 = vunpack.c.l.b16 %v437
        %v662 = vunpack.c.l.b16 %v438
        %v663 = vunpack.c.l.b16 %v439
        %v664 = vunpack.c.l.b16 %v440
        %v665 = vunpack.c.l.b16 %v441
        %v666 = vunpack.c.l.b16 %v442
        %v667 = vunpack.c.l.b16 %v443
        %v668 = vunpack.c.l.b16 %v444
        %v669 = vunpack.c.l.b16 %v445
        %v670 = vunpack.c.l.b16 %v446
        %v671 = vunpack.c.l.b16 %v447
        %v672 = vunpack.c.l.b16 %v448
        %v673 = vunpack.c.l.b16 %v449
        %v674 = vunpack.c.l.b16 %v450
        %v675 = vunpack.c.l.b16 %v451
        %v676 = vunpack.c.l.b16 %v452
        %v677 = vunpack.c.l.b16 %v453
        %v678 = vunpack.c.l.b16 %v454
        %v679 = vunpack.c.l.b16 %v455
        %v680 = vunpack.c.l.b16 %v456
        %v681 = vunpack.c.l.b16 %v457
        %v682 = vunpack.c.l.b16 %v458
        %v683 = vunpack.c.l.b16 %v459
        %v684 = vunpack.c.l.b16 %v460
        %v685 = vunpack.c.l.b16 %v461
        %v686 = vunpack.c.l.b16 %v462
        %v687 = vunpack.c.l.b16 %v463
        %v688 = vunpack.c.l.b16 %v464
        %v689 = vunpack.c.l.b16 %v465
        %v690 = vpack.c.b16 %v643, %v642
        %v691 = vpack.c.b16 %v645, %v644
        %v692 = vpack.c.b16 %v647, %v646
        %v693 = vpack.c.b16 %v649, %v648
        %v694 = vpack.c.b16 %v651, %v650
        %v695 = vpack.c.b16 %v653, %v652
        %v696 = vpack.c.b16 %v655, %v654
        %v697 = vpack.c.b16 %v657, %v656
        %v698 = vpack.c.b16 %v659, %v658
        %v699 = vpack.c.b16 %v661, %v660
        %v700 = vpack.c.b16 %v663, %v662
        %v701 = vpack.c.b16 %v665, %v664
        %v702 = vpack.c.b16 %v667, %v666
        %v703 = vpack.c.b16 %v669, %v668
        %v704 = vpack.c.b16 %v671, %v670
        %v705 = vpack.c.b16 %v673, %v672
        %v706 = vpack.c.b16 %v675, %v674
        %v707 = vpack.c.b16 %v677, %v676
        %v708 = vpack.c.b16 %v679, %v678
        %v709 = vpack.c.b16 %v681, %v680
        %v710 = vpack.c.b16 %v683, %v682
        %v711 = vpack.c.b16 %v685, %v684
        %v712 = vpack.c.b16 %v687, %v686
        %v713 = vpack.c.b16 %v689, %v688
        %738 = vmatprep.subr.bf16.mxu0 0
        %739 = vmatpush1.bf16.msra.mxu0 %v690
        %740 = vmatprep.subr.bf16.mxu0 0
        %741 = vmatpush1.bf16.msra.mxu0 %v691
        %742 = vmatprep.subr.bf16.mxu0 0
        %743 = vmatpush1.bf16.msra.mxu0 %v692
        %744 = vmatprep.subr.bf16.mxu0 0
        %745 = vmatpush1.bf16.msra.mxu0 %v693
        %746 = vmatprep.subr.bf16.mxu0 0
        %747 = vmatpush1.bf16.msra.mxu0 %v694
        %748 = vmatprep.subr.bf16.mxu0 0
        %749 = vmatpush1.bf16.msra.mxu0 %v695
        %750 = vmatprep.subr.bf16.mxu0 0
        %751 = vmatpush1.bf16.msra.mxu0 %v696
        %752 = vmatprep.subr.bf16.mxu0 0
        %753 = vmatpush1.bf16.msra.mxu0 %v697
        %754 = vmatprep.subr.bf16.mxu0 0
        %755 = vmatpush1.bf16.msra.mxu0 %v698
        %756 = vmatprep.subr.bf16.mxu0 0
        %757 = vmatpush1.bf16.msra.mxu0 %v699
        %758 = vmatprep.subr.bf16.mxu0 0
        %759 = vmatpush1.bf16.msra.mxu0 %v700
        %760 = vmatprep.subr.bf16.mxu0 0
        %761 = vmatpush1.bf16.msra.mxu0 %v701
        %762 = vmatprep.subr.bf16.mxu0 0
        %763 = vmatpush1.bf16.msra.mxu0 %v702
        %764 = vmatprep.subr.bf16.mxu0 0
        %765 = vmatpush1.bf16.msra.mxu0 %v703
        %766 = vmatprep.subr.bf16.mxu0 0
        %767 = vmatpush1.bf16.msra.mxu0 %v704
        %768 = vmatprep.subr.bf16.mxu0 0
        %769 = vmatpush1.bf16.msra.mxu0 %v705
        %770 = vmatprep.mubr.bf16.mxu0 %v547
        %771 = vmatmul.mubr.bf16.gmra.mrb[0].mxu0 %v546
        %v772 = vpop.f32.mrb[0].mxu0
        %v773 = vadd.f32 0.0, %v772
        %v774 = vpop.f32.mrb[0].mxu0
        %v775 = vpop.f32.mrb[0].mxu0
        %v776 = vadd.f32 0.0, %v775
        %v777 = vpop.f32.mrb[0].mxu0
        %778 = vmatprep.mubr.bf16.mxu0 %v550
        %779 = vmatmul.mubr.bf16.gmra.mrb[0].mxu0 %v549
        %v780 = vpop.f32.mrb[0].mxu0
        %v781 = vadd.f32 0.0, %v780
        %v782 = vpop.f32.mrb[0].mxu0
        %v783 = vpop.f32.mrb[0].mxu0
        %v784 = vadd.f32 0.0, %v783
        %v785 = vpop.f32.mrb[0].mxu0
        %786 = vmatprep.mubr.bf16.mxu0 %v553
        %787 = vmatmul.mubr.bf16.gmra.mrb[0].mxu0 %v552
        %v788 = vpop.f32.mrb[0].mxu0
        %v789 = vadd.f32 0.0, %v788
        %v790 = vpop.f32.mrb[0].mxu0
        %v791 = vpop.f32.mrb[0].mxu0
        %v792 = vadd.f32 0.0, %v791
        %v793 = vpop.f32.mrb[0].mxu0
        %794 = vmatprep.mubr.bf16.mxu0 %v556
        %795 = vmatmul.mubr.bf16.gmra.mrb[0].mxu0 %v555
        %v796 = vpop.f32.mrb[0].mxu0
        %v797 = vadd.f32 0.0, %v796
        %v798 = vpop.f32.mrb[0].mxu0
        %v799 = vpop.f32.mrb[0].mxu0
        %v800 = vadd.f32 0.0, %v799
        %v801 = vpop.f32.mrb[0].mxu0
        %802 = vmatprep.mubr.bf16.mxu0 %v559
        %803 = vmatmul.mubr.bf16.gmra.mrb[0].mxu0 %v558
        %v804 = vpop.f32.mrb[0].mxu0
        %v805 = vadd.f32 0.0, %v804
        %v806 = vpop.f32.mrb[0].mxu0
        %v807 = vpop.f32.mrb[0].mxu0
        %v808 = vadd.f32 0.0, %v807
        %v809 = vpop.f32.mrb[0].mxu0
        %810 = vmatprep.mubr.bf16.mxu0 %v562
        %811 = vmatmul.mubr.bf16.gmra.mrb[0].mxu0 %v561
        %v812 = vpop.f32.mrb[0].mxu0
        %v813 = vadd.f32 0.0, %v812
        %v814 = vpop.f32.mrb[0].mxu0
        %v815 = vpop.f32.mrb[0].mxu0
        %v816 = vadd.f32 0.0, %v815
        %v817 = vpop.f32.mrb[0].mxu0
        %818 = vmatprep.mubr.bf16.mxu0 %v565
        %819 = vmatmul.mubr.bf16.gmra.mrb[0].mxu0 %v564
        %v820 = vpop.f32.mrb[0].mxu0
        %v821 = vadd.f32 0.0, %v820
        %v822 = vpop.f32.mrb[0].mxu0
        %v823 = vpop.f32.mrb[0].mxu0
        %v824 = vadd.f32 0.0, %v823
        %v825 = vpop.f32.mrb[0].mxu0
        %826 = vmatprep.mubr.bf16.mxu0 %v568
        %827 = vmatmul.mubr.bf16.gmra.mrb[0].mxu0 %v567
        %v828 = vpop.f32.mrb[0].mxu0
        %v829 = vadd.f32 0.0, %v828
        %v830 = vpop.f32.mrb[0].mxu0
        %v831 = vpop.f32.mrb[0].mxu0
        %v832 = vadd.f32 0.0, %v831
        %v833 = vpop.f32.mrb[0].mxu0
        %834 = vdwg.mxu0
        %835 = vmatprep.subr.bf16.mxu0 0
        %836 = vmatpush1.bf16.msra.mxu0 %v706
        %837 = vmatprep.subr.bf16.mxu0 0
        %838 = vmatpush1.bf16.msra.mxu0 %v707
        %839 = vmatprep.subr.bf16.mxu0 0
        %840 = vmatpush1.bf16.msra.mxu0 %v708
        %841 = vmatprep.subr.bf16.mxu0 0
        %842 = vmatpush1.bf16.msra.mxu0 %v709
        %843 = vmatprep.subr.bf16.mxu0 0
        %844 = vmatpush1.bf16.msra.mxu0 %v710
        %845 = vmatprep.subr.bf16.mxu0 0
        %846 = vmatpush1.bf16.msra.mxu0 %v711
        %847 = vmatprep.subr.bf16.mxu0 0
        %848 = vmatpush1.bf16.msra.mxu0 %v712
        %849 = vmatprep.subr.bf16.mxu0 0
        %850 = vmatpush1.bf16.msra.mxu0 %v713
        %851 = vmatprep.subr.bf16.mxu0 0
        %852 = vmatpush1.bf16.msra.mxu0 0
        %853 = vmatprep.subr.bf16.mxu0 0
        %854 = vmatpush1.bf16.msra.mxu0 0
        %855 = vmatprep.subr.bf16.mxu0 0
        %856 = vmatpush1.bf16.msra.mxu0 0
        %857 = vmatprep.subr.bf16.mxu0 0
        %858 = vmatpush1.bf16.msra.mxu0 0
        %859 = vmatprep.subr.bf16.mxu0 0
        %860 = vmatpush1.bf16.msra.mxu0 0
        %861 = vmatprep.subr.bf16.mxu0 0
        %862 = vmatpush1.bf16.msra.mxu0 0
        %863 = vmatprep.subr.bf16.mxu0 0
        %864 = vmatpush1.bf16.msra.mxu0 0
        %865 = vmatprep.subr.bf16.mxu0 0
        %866 = vmatpush1.bf16.msra.mxu0 0
        %867 = vmatprep.mubr.bf16.mxu0 0
        %868 = vmatmul.mubr.bf16.gmra.mrb[0].mxu0 %v548
        %v869 = vpop.f32.mrb[0].mxu0
        %v870 = vadd.f32 %v773, %v869
        %v871 = vpop.f32.mrb[0].mxu0
        %v872 = vpop.f32.mrb[0].mxu0
        %v873 = vadd.f32 %v776, %v872
        %v874 = vpop.f32.mrb[0].mxu0
        %875 = vmatprep.mubr.bf16.mxu0 0
        %876 = vmatmul.mubr.bf16.gmra.mrb[0].mxu0 %v551
        %v877 = vpop.f32.mrb[0].mxu0
        %v878 = vadd.f32 %v781, %v877
        %v879 = vpop.f32.mrb[0].mxu0
        %v880 = vpop.f32.mrb[0].mxu0
        %v881 = vadd.f32 %v784, %v880
        %v882 = vpop.f32.mrb[0].mxu0
        %883 = vmatprep.mubr.bf16.mxu0 0
        %884 = vmatmul.mubr.bf16.gmra.mrb[0].mxu0 %v554
        %v885 = vpop.f32.mrb[0].mxu0
        %v886 = vadd.f32 %v789, %v885
        %v887 = vpop.f32.mrb[0].mxu0
        %v888 = vpop.f32.mrb[0].mxu0
        %v889 = vadd.f32 %v792, %v888
        %v890 = vpop.f32.mrb[0].mxu0
        %891 = vmatprep.mubr.bf16.mxu0 0
        %892 = vmatmul.mubr.bf16.gmra.mrb[0].mxu0 %v557
        %v893 = vpop.f32.mrb[0].mxu0
        %v894 = vadd.f32 %v797, %v893
        %v895 = vpop.f32.mrb[0].mxu0
        %v896 = vpop.f32.mrb[0].mxu0
        %v897 = vadd.f32 %v800, %v896
        %v898 = vpop.f32.mrb[0].mxu0
        %899 = vmatprep.mubr.bf16.mxu0 0
        %900 = vmatmul.mubr.bf16.gmra.mrb[0].mxu0 %v560
        %v901 = vpop.f32.mrb[0].mxu0
        %v902 = vadd.f32 %v805, %v901
        %v903 = vpop.f32.mrb[0].mxu0
        %v904 = vpop.f32.mrb[0].mxu0
        %v905 = vadd.f32 %v808, %v904
        %v906 = vpop.f32.mrb[0].mxu0
        %907 = vmatprep.mubr.bf16.mxu0 0
        %908 = vmatmul.mubr.bf16.gmra.mrb[0].mxu0 %v563
        %v909 = vpop.f32.mrb[0].mxu0
        %v910 = vadd.f32 %v813, %v909
        %v911 = vpop.f32.mrb[0].mxu0
        %v912 = vpop.f32.mrb[0].mxu0
        %v913 = vadd.f32 %v816, %v912
        %v914 = vpop.f32.mrb[0].mxu0
        %915 = vmatprep.mubr.bf16.mxu0 0
        %916 = vmatmul.mubr.bf16.gmra.mrb[0].mxu0 %v566
        %v917 = vpop.f32.mrb[0].mxu0
        %v918 = vadd.f32 %v821, %v917
        %v919 = vpop.f32.mrb[0].mxu0
        %v920 = vpop.f32.mrb[0].mxu0
        %v921 = vadd.f32 %v824, %v920
        %v922 = vpop.f32.mrb[0].mxu0
        %923 = vmatprep.mubr.bf16.mxu0 0
        %924 = vmatmul.mubr.bf16.gmra.mrb[0].mxu0 %v569
        %v925 = vpop.f32.mrb[0].mxu0
        %v926 = vadd.f32 %v829, %v925
        %v927 = vpop.f32.mrb[0].mxu0
        %v928 = vpop.f32.mrb[0].mxu0
        %v929 = vadd.f32 %v832, %v928
        %v930 = vpop.f32.mrb[0].mxu0
        %931 = vdwg.mxu0
        %v932 = vadd.f32 %v370, %v870
        %v933 = vadd.f32 %v371, %v873
        %v934 = vadd.f32 %v372, %v878
        %v935 = vadd.f32 %v373, %v881
        %v936 = vadd.f32 %v374, %v886
        %v937 = vadd.f32 %v375, %v889
        %v938 = vadd.f32 %v376, %v894
        %v939 = vadd.f32 %v377, %v897
        %v940 = vadd.f32 %v378, %v902
        %v941 = vadd.f32 %v379, %v905
        %v942 = vadd.f32 %v380, %v910
        %v943 = vadd.f32 %v381, %v913
        %v944 = vadd.f32 %v382, %v918
        %v945 = vadd.f32 %v383, %v921
        %v946 = vadd.f32 %v384, %v926
        %v947 = vadd.f32 %v385, %v929
        %948 = vst [vmem:[#allocation2] sm:$0xff] %v932
        %949 = vst [vmem:[#allocation2 + $0x8] sm:$0xff] %v933
        %950 = vst [vmem:[#allocation2 + $0x10] sm:$0xff] %v934
        %951 = vst [vmem:[#allocation2 + $0x18] sm:$0xff] %v935
        %952 = vst [vmem:[#allocation2 + $0x20] sm:$0xff] %v936
        %953 = vst [vmem:[#allocation2 + $0x28] sm:$0xff] %v937
        %954 = vst [vmem:[#allocation2 + $0x30] sm:$0xff] %v938
        %955 = vst [vmem:[#allocation2 + $0x38] sm:$0xff] %v939
        %956 = vst [vmem:[#allocation2 + $0x40] sm:$0xff] %v940
        %957 = vst [vmem:[#allocation2 + $0x48] sm:$0xff] %v941
        %958 = vst [vmem:[#allocation2 + $0x50] sm:$0xff] %v942
        %959 = vst [vmem:[#allocation2 + $0x58] sm:$0xff] %v943
        %960 = vst [vmem:[#allocation2 + $0x60] sm:$0xff] %v944
        %961 = vst [vmem:[#allocation2 + $0x68] sm:$0xff] %v945
        %962 = vst [vmem:[#allocation2 + $0x70] sm:$0xff] %v946
        %963 = vst [vmem:[#allocation2 + $0x78] sm:$0xff] %v947
        %p964 = scmp.eq.s32.totalorder %s22, 2
        // Predicated region
        $region59: #{basic_block_forward.5} parent=49 // pred_check
          %p965 = pneg %p964
        $region60: #{basic_block_forward.5} parent=49 // pred_check_branch
          %967 = sbr.rel (%p965) target = $region62
        $region61: #{basic_block_forward.5} parent=49 // pred_region
          %v968 = vld [vmem:[#allocation2] sm:$0xff]
          %v969 = vld [vmem:[#allocation2 + $0x8] sm:$0xff]
          %v970 = vld [vmem:[#allocation2 + $0x10] sm:$0xff]
          %v971 = vld [vmem:[#allocation2 + $0x18] sm:$0xff]
          %v972 = vld [vmem:[#allocation2 + $0x20] sm:$0xff]
          %v973 = vld [vmem:[#allocation2 + $0x28] sm:$0xff]
          %v974 = vld [vmem:[#allocation2 + $0x30] sm:$0xff]
          %v975 = vld [vmem:[#allocation2 + $0x38] sm:$0xff]
          %v976 = vld [vmem:[#allocation2 + $0x40] sm:$0xff]
          %v977 = vld [vmem:[#allocation2 + $0x48] sm:$0xff]
          %v978 = vld [vmem:[#allocation2 + $0x50] sm:$0xff]
          %v979 = vld [vmem:[#allocation2 + $0x58] sm:$0xff]
          %v980 = vld [vmem:[#allocation2 + $0x60] sm:$0xff]
          %v981 = vld [vmem:[#allocation2 + $0x68] sm:$0xff]
          %v982 = vld [vmem:[#allocation2 + $0x70] sm:$0xff]
          %v983 = vld [vmem:[#allocation2 + $0x78] sm:$0xff]
          %984 = vst [vmem:[%s340] sm:$0xff] %v968
          %985 = vst [vmem:[%s340 + $0x8] sm:$0xff] %v969
          %986 = vst [vmem:[%s340 + $0x10] sm:$0xff] %v970
          %987 = vst [vmem:[%s340 + $0x18] sm:$0xff] %v971
          %988 = vst [vmem:[%s340 + $0x20] sm:$0xff] %v972
          %989 = vst [vmem:[%s340 + $0x28] sm:$0xff] %v973
          %990 = vst [vmem:[%s340 + $0x30] sm:$0xff] %v974
          %991 = vst [vmem:[%s340 + $0x38] sm:$0xff] %v975
          %992 = vst [vmem:[%s340 + $0x40] sm:$0xff] %v976
          %993 = vst [vmem:[%s340 + $0x48] sm:$0xff] %v977
          %994 = vst [vmem:[%s340 + $0x50] sm:$0xff] %v978
          %995 = vst [vmem:[%s340 + $0x58] sm:$0xff] %v979
          %996 = vst [vmem:[%s340 + $0x60] sm:$0xff] %v980
          %997 = vst [vmem:[%s340 + $0x68] sm:$0xff] %v981
          %998 = vst [vmem:[%s340 + $0x70] sm:$0xff] %v982
          %999 = vst [vmem:[%s340 + $0x78] sm:$0xff] %v983
          %v1000 = vadd.f32 %v968, %v969
          %v1001 = vadd.f32 %v1000, %v970
          %v1002 = vadd.f32 %v1001, %v971
          %v1003 = vadd.f32 %v1002, %v972
          %v1004 = vadd.f32 %v1003, %v973
          %v1005 = vadd.f32 %v1004, %v974
          %v1006 = vadd.f32 %v1005, %v975
          %v1007 = vadd.f32 %v1006, %v976
          %v1008 = vadd.f32 %v1007, %v977
          %v1009 = vadd.f32 %v1008, %v978
          %v1010 = vadd.f32 %v1009, %v979
          %v1011 = vadd.f32 %v1010, %v980
          %v1012 = vadd.f32 %v1011, %v981
          %v1013 = vadd.f32 %v1012, %v982
          %v1014 = vadd.f32 %v1013, %v983
          %v1015 = vrot.slane %v1014, 4
          %v1016 = vadd.f32 %v1014, %v1015
          %v1017 = vrot.slane %v1016, 2
          %v1018 = vadd.f32 %v1016, %v1017
          %v1019 = vrot.slane %v1018, 1
          %v1020 = vadd.f32 %v1018, %v1019
          %v1021 = vmul.f32 %v968, %v968
          %v1022 = vmul.f32 %v969, %v969
          %v1023 = vmul.f32 %v970, %v970
          %v1024 = vmul.f32 %v971, %v971
          %v1025 = vmul.f32 %v972, %v972
          %v1026 = vmul.f32 %v973, %v973
          %v1027 = vmul.f32 %v974, %v974
          %v1028 = vmul.f32 %v975, %v975
          %v1029 = vmul.f32 %v976, %v976
          %v1030 = vmul.f32 %v977, %v977
          %v1031 = vmul.f32 %v978, %v978
          %v1032 = vmul.f32 %v979, %v979
          %v1033 = vmul.f32 %v980, %v980
          %v1034 = vmul.f32 %v981, %v981
          %v1035 = vmul.f32 %v982, %v982
          %v1036 = vmul.f32 %v983, %v983
          %v1037 = vadd.f32 %v1021, %v1022
          %v1038 = vadd.f32 %v1037, %v1023
          %v1039 = vadd.f32 %v1038, %v1024
          %v1040 = vadd.f32 %v1039, %v1025
          %v1041 = vadd.f32 %v1040, %v1026
          %v1042 = vadd.f32 %v1041, %v1027
          %v1043 = vadd.f32 %v1042, %v1028
          %v1044 = vadd.f32 %v1043, %v1029
          %v1045 = vadd.f32 %v1044, %v1030
          %v1046 = vadd.f32 %v1045, %v1031
          %v1047 = vadd.f32 %v1046, %v1032
          %v1048 = vadd.f32 %v1047, %v1033
          %v1049 = vadd.f32 %v1048, %v1034
          %v1050 = vadd.f32 %v1049, %v1035
          %v1051 = vadd.f32 %v1050, %v1036
          %v1052 = vrot.slane %v1051, 4
          %v1053 = vadd.f32 %v1051, %v1052
          %v1054 = vrot.slane %v1053, 2
          %v1055 = vadd.f32 %v1053, %v1054
          %v1056 = vrot.slane %v1055, 1
          %v1057 = vadd.f32 %v1055, %v1056
          %vm1058 = vcmask 1040384
          %v1059 = vsel %vm1058, %v1020, %v1057
          %vm1060 = vcmask 1041408
          %v1061 = vsel %vm1060, %v1059, 0.0
          %1062 = vst [vmem:[%s348] sm:$0xff] %v1061
        $region62: #{basic_block_forward.5} parent=49 // pred_fallthru
          _
        %s1063 = smul.u32 16, %s20
        %p1064 = scmp.lt.s32.totalorder %s1063, 15
        %s1065 = scalar_select %p1064, %s1063, 15
        %p1066 = scmp.lt.s32.totalorder %s21, 0
        %s1067 = scalar_select %p1066, %s21, 0
        %s1068 = sadd.s32 %s1067, %s1065
        %s1069 = smul.addr %s1068, 8
        %s1070 = scalar_lea.vmem %s2, %s1069
        %p1071 = scmp.lt.s32.totalorder %s20, 0
        %s1072 = scalar_select %p1071, %s20, 0
        %p1073 = scmp.lt.s32.totalorder %s21, 0
        %s1074 = scalar_select %p1073, %s21, 0
        %s1075 = sadd.s32 %s1074, %s1072
        %s1076 = smul.addr %s1075, 8
        %s1077 = scalar_lea.vmem %s3, %s1076
        // Predicated region
        $region63: #{basic_block_forward.5} parent=49 // pred_check
          %p1078 = pneg %p110
        $region64: #{basic_block_forward.5} parent=49 // pred_check_branch
          %1080 = sbr.rel (%p1078) target = $region66
        $region65: #{basic_block_forward.5} parent=49 // pred_region
          %s1081 = smul.u32 16, %s20
        $region66: #{basic_block_forward.5} parent=49 // pred_fallthru
          _
        // Predicated region
        $region67: #{basic_block_forward.5} parent=49 // pred_check
          %p1082 = pneg %p138
        $region68: #{basic_block_forward.5} parent=49 // pred_check_branch
          %1084 = sbr.rel (%p1082) target = $region70
        $region69: #{basic_block_forward.5} parent=49 // pred_region
          _
        $region70: #{basic_block_forward.5} parent=49 // pred_fallthru
          _
        // Predicated region
        $region71: #{basic_block_forward.5} parent=49 // pred_check
          %p1085 = pneg %p110
        $region72: #{basic_block_forward.5} parent=49 // pred_check_branch
          %1087 = sbr.rel (%p1085) target = $region74
        $region73: #{basic_block_forward.5} parent=49 // pred_region
          %s1088 = smul.u32 16, %s20
          %p1089 = scmp.lt.s32.totalorder %s1088, 15
          %s1090 = scalar_select %p1089, %s1088, 15
          %p1091 = scmp.lt.s32.totalorder %s21, 0
          %s1092 = scalar_select %p1091, %s21, 0
          %s1093 = sadd.s32 %s1092, %s1090
          %s1094 = smul.addr %s1093, 8
          %s1095 = scalar_lea.vmem %s2, %s1094
        $region74: #{basic_block_forward.5} parent=49 // pred_fallthru
          _
        // Predicated region
        $region75: #{basic_block_forward.5} parent=49 // pred_check
          %p1096 = pneg %p138
        $region76: #{basic_block_forward.5} parent=49 // pred_check_branch
          %1098 = sbr.rel (%p1096) target = $region78
        $region77: #{basic_block_forward.5} parent=49 // pred_region
          %p1099 = scmp.lt.s32.totalorder %s20, 0
          %s1100 = scalar_select %p1099, %s20, 0
          %p1101 = scmp.lt.s32.totalorder %s21, 0
          %s1102 = scalar_select %p1101, %s21, 0
          %s1103 = sadd.s32 %s1102, %s1100
          %s1104 = smul.addr %s1103, 8
          %s1105 = scalar_lea.vmem %s3, %s1104
        $region78: #{basic_block_forward.5} parent=49 // pred_fallthru
          _
      $region50: #{basic_block_forward.5} parent=5 // pred_fallthru
        _
      %p1106 = scmp.le.s32.totalorder 2, %s10
      // Predicated region
      $region79: #{basic_block_forward.5} parent=5 // pred_check
        %p1107 = pneg %p1106
      $region80: #{basic_block_forward.5} parent=5 // pred_check_branch
        %1109 = sbr.rel (%p1107) target = $region82
      $region81: #{basic_block_forward.5} parent=5 // pred_region
        %s1110 = ssub.s32 %s10, 2
      $region82: #{basic_block_forward.5} parent=5 // pred_fallthru
        _
    $region6: #{basic_block_forward.5} parent=1 // loop_footer
      %s14 = sadd.s32 1, %s10
    $region7: #{basic_block_forward.5} parent=1 // loop_footer_branch
      %9 = sbr.rel target = $region3
    $region8: #{basic_block_forward.5} parent=1 // loop_exit
      _

// kernel: basic_block_forward.9
$region0: #{basic_block_forward.9}
  #allocation0 [shape = 'u32[]', space=smem, size = 0x4, offset = 0x4, fixed_abs, tag = 'smem constant byte address 0x4 - core index']
  #allocation1 [shape = 'u32[144,128]{1,0:T(1,128)}', space=vmem, size = 0x12000, scoped, tag = 'internal scratch']
  %s0 = inlined_call_operand.vmem [shape: f32[128,128], index: 0, kind: input, shape index: {}]
  %s1 = inlined_call_operand.vmem [shape: f32[128,128], index: 1, kind: input, shape index: {}]
  %s2 = inlined_call_operand.vmem [shape: f32[1,128], index: 2, kind: input, shape index: {}]
  %s3 = inlined_call_operand.vmem [shape: f32[1,128], index: 3, kind: input, shape index: {}]
  %s4 = inlined_call_operand.vmem [shape: f32[1,128], index: 4, kind: input, shape index: {}]
  %s5 = inlined_call_operand.vmem [shape: f32[1,128], index: 5, kind: input, shape index: {}]
  %s6 = inlined_call_operand.vmem [shape: f32[128,128], index: 6, kind: output, shape index: {}]
  %s7 = sld [smem:[#allocation0]]
  $region34: #{basic_block_forward.9} parent=0
    _
  %s9 = ssub.s32 1, %s7
  %s10 = scalar_select 0, %s9, %s7
  // Predicated region
  $region2: #{basic_block_forward.9} parent=0 // pred_check
    _
  $region3: #{basic_block_forward.9} parent=0 // pred_check_branch
    %12 = sbr.rel (0) target = $region5
  $region4: #{basic_block_forward.9} parent=0 // pred_region
    _
  $region5: #{basic_block_forward.9} parent=0 // pred_fallthru
    _
  // Predicated region
  $region6: #{basic_block_forward.9} parent=0 // pred_check
    _
  $region7: #{basic_block_forward.9} parent=0 // pred_check_branch
    %14 = sbr.rel (0) target = $region9
  $region8: #{basic_block_forward.9} parent=0 // pred_region
    _
  $region9: #{basic_block_forward.9} parent=0 // pred_fallthru
    _
  // Predicated region
  $region10: #{basic_block_forward.9} parent=0 // pred_check
    _
  $region11: #{basic_block_forward.9} parent=0 // pred_check_branch
    %16 = sbr.rel (0) target = $region13
  $region12: #{basic_block_forward.9} parent=0 // pred_region
    _
  $region13: #{basic_block_forward.9} parent=0 // pred_fallthru
    _
  // Predicated region
  $region14: #{basic_block_forward.9} parent=0 // pred_check
    _
  $region15: #{basic_block_forward.9} parent=0 // pred_check_branch
    %18 = sbr.rel (0) target = $region17
  $region16: #{basic_block_forward.9} parent=0 // pred_region
    _
  $region17: #{basic_block_forward.9} parent=0 // pred_fallthru
    _
  // Predicated region
  $region18: #{basic_block_forward.9} parent=0 // pred_check
    _
  $region19: #{basic_block_forward.9} parent=0 // pred_check_branch
    %20 = sbr.rel (0) target = $region21
  $region20: #{basic_block_forward.9} parent=0 // pred_region
    _
  $region21: #{basic_block_forward.9} parent=0 // pred_fallthru
    _
  // Predicated region
  $region22: #{basic_block_forward.9} parent=0 // pred_check
    _
  $region23: #{basic_block_forward.9} parent=0 // pred_check_branch
    %22 = sbr.rel (0) target = $region25
  $region24: #{basic_block_forward.9} parent=0 // pred_region
    _
  $region25: #{basic_block_forward.9} parent=0 // pred_fallthru
    _
  %v23 = vld [vmem:[%s0] sm:$0xff]
  %v24 = vld [vmem:[%s0 + $0x8] sm:$0xff]
  %v25 = vld [vmem:[%s0 + $0x10] sm:$0xff]
  %v26 = vld [vmem:[%s0 + $0x18] sm:$0xff]
  %v27 = vld [vmem:[%s0 + $0x20] sm:$0xff]
  %v28 = vld [vmem:[%s0 + $0x28] sm:$0xff]
  %v29 = vld [vmem:[%s0 + $0x30] sm:$0xff]
  %v30 = vld [vmem:[%s0 + $0x38] sm:$0xff]
  %v31 = vld [vmem:[%s0 + $0x40] sm:$0xff]
  %v32 = vld [vmem:[%s0 + $0x48] sm:$0xff]
  %v33 = vld [vmem:[%s0 + $0x50] sm:$0xff]
  %v34 = vld [vmem:[%s0 + $0x58] sm:$0xff]
  %v35 = vld [vmem:[%s0 + $0x60] sm:$0xff]
  %v36 = vld [vmem:[%s0 + $0x68] sm:$0xff]
  %v37 = vld [vmem:[%s0 + $0x70] sm:$0xff]
  %v38 = vld [vmem:[%s0 + $0x78] sm:$0xff]
  %v39 = vld [vmem:[%s2] sm:$0x1]
  %v41 = vlaneseq
  %v42 = vshrl.u32 %v41, 7
  %v43 = vsub.s32 0, %v42
  %v44 = vrot.slane %v39, %v43
  %v46 = vmul.f32 %v23, %v44
  %v47 = vmul.f32 %v24, %v44
  %v48 = vmul.f32 %v25, %v44
  %v49 = vmul.f32 %v26, %v44
  %v50 = vmul.f32 %v27, %v44
  %v51 = vmul.f32 %v28, %v44
  %v52 = vmul.f32 %v29, %v44
  %v53 = vmul.f32 %v30, %v44
  %v54 = vmul.f32 %v31, %v44
  %v55 = vmul.f32 %v32, %v44
  %v56 = vmul.f32 %v33, %v44
  %v57 = vmul.f32 %v34, %v44
  %v58 = vmul.f32 %v35, %v44
  %v59 = vmul.f32 %v36, %v44
  %v60 = vmul.f32 %v37, %v44
  %v61 = vmul.f32 %v38, %v44
  %v62 = vld [vmem:[%s3] sm:$0x1]
  %v64 = vlaneseq
  %v65 = vshrl.u32 %v64, 7
  %v66 = vsub.s32 0, %v65
  %v67 = vrot.slane %v62, %v66
  %v69 = vadd.f32 %v46, %v67
  %v70 = vadd.f32 %v47, %v67
  %v71 = vadd.f32 %v48, %v67
  %v72 = vadd.f32 %v49, %v67
  %v73 = vadd.f32 %v50, %v67
  %v74 = vadd.f32 %v51, %v67
  %v75 = vadd.f32 %v52, %v67
  %v76 = vadd.f32 %v53, %v67
  %v77 = vadd.f32 %v54, %v67
  %v78 = vadd.f32 %v55, %v67
  %v79 = vadd.f32 %v56, %v67
  %v80 = vadd.f32 %v57, %v67
  %v81 = vadd.f32 %v58, %v67
  %v82 = vadd.f32 %v59, %v67
  %v83 = vadd.f32 %v60, %v67
  %v84 = vadd.f32 %v61, %v67
  %v85 = vld [vmem:[%s1] sm:$0xff]
  %v86 = vld [vmem:[%s1 + $0x8] sm:$0xff]
  %v87 = vld [vmem:[%s1 + $0x10] sm:$0xff]
  %v88 = vld [vmem:[%s1 + $0x18] sm:$0xff]
  %v89 = vld [vmem:[%s1 + $0x20] sm:$0xff]
  %v90 = vld [vmem:[%s1 + $0x28] sm:$0xff]
  %v91 = vld [vmem:[%s1 + $0x30] sm:$0xff]
  %v92 = vld [vmem:[%s1 + $0x38] sm:$0xff]
  %v93 = vld [vmem:[%s1 + $0x40] sm:$0xff]
  %v94 = vld [vmem:[%s1 + $0x48] sm:$0xff]
  %v95 = vld [vmem:[%s1 + $0x50] sm:$0xff]
  %v96 = vld [vmem:[%s1 + $0x58] sm:$0xff]
  %v97 = vld [vmem:[%s1 + $0x60] sm:$0xff]
  %v98 = vld [vmem:[%s1 + $0x68] sm:$0xff]
  %v99 = vld [vmem:[%s1 + $0x70] sm:$0xff]
  %v100 = vld [vmem:[%s1 + $0x78] sm:$0xff]
  %v101 = vld [vmem:[%s4] sm:$0x1]
  %v103 = vlaneseq
  %v104 = vshrl.u32 %v103, 7
  %v105 = vsub.s32 0, %v104
  %v106 = vrot.slane %v101, %v105
  %v108 = vmul.f32 %v85, %v106
  %v109 = vmul.f32 %v86, %v106
  %v110 = vmul.f32 %v87, %v106
  %v111 = vmul.f32 %v88, %v106
  %v112 = vmul.f32 %v89, %v106
  %v113 = vmul.f32 %v90, %v106
  %v114 = vmul.f32 %v91, %v106
  %v115 = vmul.f32 %v92, %v106
  %v116 = vmul.f32 %v93, %v106
  %v117 = vmul.f32 %v94, %v106
  %v118 = vmul.f32 %v95, %v106
  %v119 = vmul.f32 %v96, %v106
  %v120 = vmul.f32 %v97, %v106
  %v121 = vmul.f32 %v98, %v106
  %v122 = vmul.f32 %v99, %v106
  %v123 = vmul.f32 %v100, %v106
  %v124 = vld [vmem:[%s5] sm:$0x1]
  %v126 = vlaneseq
  %v127 = vshrl.u32 %v126, 7
  %v128 = vsub.s32 0, %v127
  %v129 = vrot.slane %v124, %v128
  %v131 = vadd.f32 %v108, %v129
  %v132 = vadd.f32 %v109, %v129
  %v133 = vadd.f32 %v110, %v129
  %v134 = vadd.f32 %v111, %v129
  %v135 = vadd.f32 %v112, %v129
  %v136 = vadd.f32 %v113, %v129
  %v137 = vadd.f32 %v114, %v129
  %v138 = vadd.f32 %v115, %v129
  %v139 = vadd.f32 %v116, %v129
  %v140 = vadd.f32 %v117, %v129
  %v141 = vadd.f32 %v118, %v129
  %v142 = vadd.f32 %v119, %v129
  %v143 = vadd.f32 %v120, %v129
  %v144 = vadd.f32 %v121, %v129
  %v145 = vadd.f32 %v122, %v129
  %v146 = vadd.f32 %v123, %v129
  %v147 = vadd.f32 %v69, %v131
  %v148 = vadd.f32 %v70, %v132
  %v149 = vadd.f32 %v71, %v133
  %v150 = vadd.f32 %v72, %v134
  %v151 = vadd.f32 %v73, %v135
  %v152 = vadd.f32 %v74, %v136
  %v153 = vadd.f32 %v75, %v137
  %v154 = vadd.f32 %v76, %v138
  %v155 = vadd.f32 %v77, %v139
  %v156 = vadd.f32 %v78, %v140
  %v157 = vadd.f32 %v79, %v141
  %v158 = vadd.f32 %v80, %v142
  %v159 = vadd.f32 %v81, %v143
  %v160 = vadd.f32 %v82, %v144
  %v161 = vadd.f32 %v83, %v145
  %v162 = vadd.f32 %v84, %v146
  %v163 = vmax.f32 %v147, 0.0
  %v164 = vmax.f32 %v148, 0.0
  %v165 = vmax.f32 %v149, 0.0
  %v166 = vmax.f32 %v150, 0.0
  %v167 = vmax.f32 %v151, 0.0
  %v168 = vmax.f32 %v152, 0.0
  %v169 = vmax.f32 %v153, 0.0
  %v170 = vmax.f32 %v154, 0.0
  %v171 = vmax.f32 %v155, 0.0
  %v172 = vmax.f32 %v156, 0.0
  %v173 = vmax.f32 %v157, 0.0
  %v174 = vmax.f32 %v158, 0.0
  %v175 = vmax.f32 %v159, 0.0
  %v176 = vmax.f32 %v160, 0.0
  %v177 = vmax.f32 %v161, 0.0
  %v178 = vmax.f32 %v162, 0.0
  %179 = vst [vmem:[%s6] sm:$0xff] %v163
  %180 = vst [vmem:[%s6 + $0x8] sm:$0xff] %v164
  %181 = vst [vmem:[%s6 + $0x10] sm:$0xff] %v165
  %182 = vst [vmem:[%s6 + $0x18] sm:$0xff] %v166
  %183 = vst [vmem:[%s6 + $0x20] sm:$0xff] %v167
  %184 = vst [vmem:[%s6 + $0x28] sm:$0xff] %v168
  %185 = vst [vmem:[%s6 + $0x30] sm:$0xff] %v169
  %186 = vst [vmem:[%s6 + $0x38] sm:$0xff] %v170
  %187 = vst [vmem:[%s6 + $0x40] sm:$0xff] %v171
  %188 = vst [vmem:[%s6 + $0x48] sm:$0xff] %v172
  %189 = vst [vmem:[%s6 + $0x50] sm:$0xff] %v173
  %190 = vst [vmem:[%s6 + $0x58] sm:$0xff] %v174
  %191 = vst [vmem:[%s6 + $0x60] sm:$0xff] %v175
  %192 = vst [vmem:[%s6 + $0x68] sm:$0xff] %v176
  %193 = vst [vmem:[%s6 + $0x70] sm:$0xff] %v177
  %194 = vst [vmem:[%s6 + $0x78] sm:$0xff] %v178
  // Predicated region
  $region26: #{basic_block_forward.9} parent=0 // pred_check
    _
  $region27: #{basic_block_forward.9} parent=0 // pred_check_branch
    %196 = sbr.rel (0) target = $region29
  $region28: #{basic_block_forward.9} parent=0 // pred_region
    _
  $region29: #{basic_block_forward.9} parent=0 // pred_fallthru
    _
  // Predicated region
  $region30: #{basic_block_forward.9} parent=0 // pred_check
    _
  $region31: #{basic_block_forward.9} parent=0 // pred_check_branch
    %198 = sbr.rel (0) target = $region33
  $region32: #{basic_block_forward.9} parent=0 // pred_region
    _
  $region33: #{basic_block_forward.9} parent=0 // pred_fallthru
    _

</llo_original>
